<compile_context>
chip_gen: v5e
topology: v5e:2x2
jax: 0.10.0
libtpu: 0.0.40
codegen_flags: <defaults>
</compile_context>

<pallas_src>
import functools

import numpy as np

import jax
import jax.numpy as jnp
from jax.experimental import pallas as pl
from jax.experimental.pallas import tpu as pltpu


# -----------------------------------------------------------------------------
# Fused kernel: encoder + (history_mu ⊕ history_log_std) + (future_mu ⊕ future_log_std)
# One grid step handles TB whole batches (M = TB*L rows of history and of future).
# -----------------------------------------------------------------------------
def _vae_fused_kernel(hist_ref, fut_ref, avg_ref, avg_enc_ref, expand_ref,
                      we1, be1, we2, be2, we3, be3,
                      wh1, bh1, wh2, bh2, wh3, bh3,
                      wf1, bf1, wf2, bf2, wf3, bf3,
                      out_ref, *, latent_dim, mm_dtype):
    if mm_dtype == jnp.float32:
        def dot(a, b):
            return jnp.dot(a, b, preferred_element_type=jnp.float32)
    else:
        def dot(a, b):  # weights are pre-cast in the wrapper -> astype is a trace-time no-op
            return jnp.dot(a.astype(mm_dtype), b.astype(mm_dtype),
                           preferred_element_type=jnp.float32)

    hist = hist_ref[...]            # (M, D)
    fut = fut_ref[...]              # (M, D)
    avg = avg_ref[...]              # (TB, M):  per-batch mean over its L trajectory rows
    avg_enc = avg_enc_ref[...]      # (TB, 2M): per-batch mean over its 2L encoder rows
    expand = expand_ref[...]        # (M, TB):  0/1, broadcast per-batch value back to L rows

    # ----- encoder: ReLU, ReLU, linear. One pass over the row-stacked [hist; fut] block.
    # The seq-mean (over cat(history, future, dim=1)) is folded through the linear last layer.
    stacked = jnp.concatenate([hist, fut], axis=0)                 # (2M, D)
    h = jnp.maximum(dot(stacked, we1[...]) + be1[...], 0.0)
    h = jnp.maximum(dot(h, we2[...]) + be2[...], 0.0)              # (2M, 16)
    pooled = dot(avg_enc, h)                                       # (TB, 16)
    common_small = dot(pooled, we3[...]) + be3[...]                # (TB, F)
    common_rows = dot(expand, common_small)                        # (M, F)

    # ----- fused mu / log_std heads: one lane-concatenated input [common | trajectory],
    # layers 2/3 block-diagonal -> a single matmul chain computes both heads at once.
    def heads(traj, w1, b1, w2, b2, w3, b3):
        x = jnp.concatenate([common_rows, traj], axis=1)           # (M, F + D)
        hh = jnp.maximum(dot(x, w1[...]) + b1[...], 0.0)
        hh = jnp.maximum(dot(hh, w2[...]) + b2[...], 0.0)
        y = dot(hh, w3[...]) + b3[...]                             # (M, 2*latent) = [mu | log_std]
        lane = jax.lax.broadcasted_iota(jnp.int32, y.shape, 1)
        y = jnp.where(lane >= latent_dim, jnp.clip(y, -4.0, 15.0), y)   # clamp log_std only
        return dot(avg, y)                                         # (TB, 2*latent): mean over L

    mh = heads(hist, wh1, bh1, wh2, bh2, wh3, bh3)                 # [h_mu | h_log_std]
    mf = heads(fut, wf1, bf1, wf2, bf2, wf3, bf3)                  # [f_mu | f_log_std]
    out_ref[...] = jnp.concatenate([mh, mf], axis=1)               # (TB, 4*latent) slab


# -----------------------------------------------------------------------------
# Wrapper: batch-block selection, constant averaging/expand matrices, pallas_call
# -----------------------------------------------------------------------------
def _pick_batch_block(B, L, target_rows=512, min_grid_steps=1):
    """Largest divisor of B with TB*L <= target_rows (amortize per-step overhead, fill MXU
    rows).  min_grid_steps>1 (e.g. 2 on v7x) keeps several 'parallel' grid steps so both
    TensorCores get work; on single-TC chips leave it at 1."""
    divisors = [d for d in range(1, B + 1) if B % d == 0]
    ok = [d for d in divisors if d * L <= target_rows] or [1]
    tb = max(ok)
    if min_grid_steps > 1:
        cand = [d for d in ok if B // d >= min_grid_steps]
        if cand:
            tb = max(cand)
    return tb


@functools.lru_cache(maxsize=None)
def _group_matrices_np(TB, L):
    """Host-side constants keyed on (TB, L): per-batch averaging and expand matrices."""
    M = TB * L
    gid = np.arange(M, dtype=np.int32) // L
    bid = np.arange(TB, dtype=np.int32)
    avg = (bid[:, None] == gid[None, :]).astype(np.float32) / np.float32(L)        # (TB, M)
    avg_enc = np.concatenate([avg, avg], axis=1) * np.float32(0.5)                 # (TB, 2M)
    expand = (gid[:, None] == bid[None, :]).astype(np.float32)                     # (M, TB)
    return avg, avg_enc, expand


def _precast_weights(params, mm_dtype):
    """Cast weight matrices (even indices) to mm_dtype once in the wrapper; biases stay f32."""
    if mm_dtype == jnp.float32:
        return tuple(params)
    return tuple(p.astype(mm_dtype) if i % 2 == 0 else p for i, p in enumerate(params))


def vae_encode_fused(history, future, fused_params, *, mm_dtype=jnp.float32,
                     batch_block=None, min_grid_steps=1):
    """history, future: (B, L, D) timestep-marked inputs -> (h_mu, h_log_std, f_mu, f_log_std)."""
    history = history.astype(jnp.float32)
    future = future.astype(jnp.float32)
    B, L, D = history.shape

    enc = _precast_weights(fused_params["encoder"], mm_dtype)
    hh = _precast_weights(fused_params["history"], mm_dtype)
    fh = _precast_weights(fused_params["future"], mm_dtype)
    feature_dim = enc[4].shape[1]
    assert hh[0].shape[0] == feature_dim + D and fh[0].shape[0] == feature_dim + D
    latent = hh[4].shape[1] // 2
    OW = 4 * latent

    TB = batch_block if batch_block is not None else _pick_batch_block(
        B, L, min_grid_steps=min_grid_steps)
    assert B % TB == 0, f"batch_block={TB} must divide batch size B={B}"
    NB = B // TB
    M = TB * L

    hist3 = history.reshape(NB, M, D)
    fut3 = future.reshape(NB, M, D)
    avg_np, avg_enc_np, expand_np = _group_matrices_np(TB, L)
    avg = jnp.asarray(avg_np)
    avg_enc = jnp.asarray(avg_enc_np)
    expand = jnp.asarray(expand_np)

    def full2d(arr):
        return pl.BlockSpec(arr.shape, lambda b: (0, 0))

    weights = enc + hh + fh
    in_specs = [
        pl.BlockSpec((pl.Squeezed(), M, D), lambda b: (b, 0, 0)),   # history rows
        pl.BlockSpec((pl.Squeezed(), M, D), lambda b: (b, 0, 0)),   # future rows
        full2d(avg), full2d(avg_enc), full2d(expand),
    ] + [full2d(w) for w in weights]

    kernel = functools.partial(_vae_fused_kernel, latent_dim=latent, mm_dtype=mm_dtype)

    out = pl.pallas_call(
        kernel,
        out_shape=jax.ShapeDtypeStruct((NB, TB, OW), jnp.float32),
        grid_spec=pltpu.PrefetchScalarGridSpec(
            num_scalar_prefetch=0,
            grid=(NB,),
            in_specs=in_specs,
            out_specs=pl.BlockSpec((pl.Squeezed(), TB, OW), lambda b: (b, 0, 0)),
        ),
        compiler_params=pltpu.CompilerParams(dimension_semantics=("parallel",)),
    )(hist3, fut3, avg, avg_enc, expand, *weights)

    out = out.reshape(B, OW)
    return (out[:, 0:latent], out[:, latent:2 * latent],
            out[:, 2 * latent:3 * latent], out[:, 3 * latent:4 * latent])


# -----------------------------------------------------------------------------
# Parameter init (deterministic, PyTorch-Linear-style uniform bounds) + head fusion
# -----------------------------------------------------------------------------
def init_linear(key, fan_in, fan_out):
    kw, kb = jax.random.split(key)
    bound = 1.0 / jnp.sqrt(jnp.float32(fan_in))
    w = jax.random.uniform(kw, (fan_in, fan_out), jnp.float32, -bound, bound)
    b = jax.random.uniform(kb, (1, fan_out), jnp.float32, -bound, bound)
    return w, b


def init_mlp(key, dims):
    params = []
    keys = jax.random.split(key, len(dims) - 1)
    for k, din, dout in zip(keys, dims[:-1], dims[1:]):
        w, b = init_linear(k, din, dout)
        params.extend([w, b])
    return tuple(params)


def init_vae_params(key, state_dim, action_dim, feature_dim, latent_dim, additional_dim):
    in_dim = state_dim + action_dim + additional_dim
    head_in = feature_dim + in_dim
    k = jax.random.split(key, 5)
    return {
        "encoder":          init_mlp(k[0], (in_dim, 16, 16, feature_dim)),
        "history_mu":       init_mlp(k[1], (head_in, 64, 64, latent_dim)),
        "future_mu":        init_mlp(k[2], (head_in, 64, 64, latent_dim)),
        "history_log_std":  init_mlp(k[3], (head_in, 128, 128, latent_dim)),
        "future_log_std":   init_mlp(k[4], (head_in, 128, 128, latent_dim)),
    }


def _fuse_head(mu_params, ls_params, latent_dim):
    """Fuse a mu head and a log_std head into one matmul chain (done once at init).
    Layer 1 keeps the original [common | trajectory] input ordering; layers 2/3 are
    block-diagonal so output = [mu | log_std]."""
    w1m, b1m, w2m, b2m, w3m, b3m = mu_params
    w1l, b1l, w2l, b2l, w3l, b3l = ls_params
    H1, H2 = w1m.shape[1], w1l.shape[1]
    w1 = jnp.concatenate([w1m, w1l], axis=1)                  # (F+D, H1+H2)
    b1 = jnp.concatenate([b1m, b1l], axis=1)
    w2 = jnp.zeros((H1 + H2, H1 + H2), jnp.float32)           # block-diagonal layer 2
    w2 = w2.at[:H1, :H1].set(w2m).at[H1:, H1:].set(w2l)
    b2 = jnp.concatenate([b2m, b2l], axis=1)
    w3 = jnp.zeros((H1 + H2, 2 * latent_dim), jnp.float32)    # block layer 3 -> [mu | log_std]
    w3 = w3.at[:H1, :latent_dim].set(w3m).at[H1:, latent_dim:].set(w3l)
    b3 = jnp.concatenate([b3m, b3l], axis=1)
    return (w1, b1, w2, b2, w3, b3)


def fuse_vae_params(raw, latent_dim):
    return {
        "encoder": raw["encoder"],
        "history": _fuse_head(raw["history_mu"], raw["history_log_std"], latent_dim),
        "future":  _fuse_head(raw["future_mu"], raw["future_log_std"], latent_dim),
    }


# -----------------------------------------------------------------------------
# Forward pass glue
# -----------------------------------------------------------------------------
def timestep_marking(history, future):
    # TODO(synk): exact TrajectoryBuffer.timestep_marking scheme is not in the given source;
    # we append a normalized timestep column (history: t/L, future: (t+L)/L), additional_dim == 1.
    B, L, _ = history.shape
    hm = (jnp.arange(L, dtype=jnp.float32) / L)[None, :, None]
    fm = ((jnp.arange(L, dtype=jnp.float32) + L) / L)[None, :, None]
    history = jnp.concatenate([history, jnp.broadcast_to(hm, (B, L, 1))], axis=2)
    future = jnp.concatenate([future, jnp.broadcast_to(fm, (B, L, 1))], axis=2)
    return history, future


def vae_forward(fused_params, history, future, key):
    history, future = timestep_marking(history, future)          # (B, L, S+A+add)
    h_mu, h_log_std, f_mu, f_log_std = vae_encode_fused(history, future, fused_params)
    k1, k2 = jax.random.split(key)
    h_latent = h_mu + jnp.exp(h_log_std) * jax.random.normal(k1, h_mu.shape, jnp.float32)
    f_latent = f_mu + jnp.exp(f_log_std) * jax.random.normal(k2, f_mu.shape, jnp.float32)
    return h_latent, f_latent, (h_mu, h_log_std), (f_mu, f_log_std)


# -----------------------------------------------------------------------------
# Pure-JAX reference (unfused) for correctness checking of the fused kernel
# -----------------------------------------------------------------------------
def _mlp3_ref(x, params, clamp=False):
    w1, b1, w2, b2, w3, b3 = params
    h = jnp.maximum(x @ w1 + b1, 0.0)
    h = jnp.maximum(h @ w2 + b2, 0.0)
    y = h @ w3 + b3
    if clamp:
        y = jnp.clip(y, -4.0, 15.0)
    return y


def _vae_encode_ref(raw, history, future):
    B, L, _ = history.shape
    enc_in = jnp.concatenate([history, future], axis=1)
    common = jnp.mean(_mlp3_ref(enc_in, raw["encoder"]), axis=1, keepdims=True)
    common_rep = jnp.broadcast_to(common, (B, L, common.shape[-1]))
    hist_in = jnp.concatenate([common_rep, history], axis=2)
    fut_in = jnp.concatenate([common_rep, future], axis=2)
    h_mu = jnp.mean(_mlp3_ref(hist_in, raw["history_mu"]), axis=1)
    h_ls = jnp.mean(_mlp3_ref(hist_in, raw["history_log_std"], clamp=True), axis=1)
    f_mu = jnp.mean(_mlp3_ref(fut_in, raw["future_mu"]), axis=1)
    f_ls = jnp.mean(_mlp3_ref(fut_in, raw["future_log_std"], clamp=True), axis=1)
    return h_mu, h_ls, f_mu, f_ls


# -----------------------------------------------------------------------------
if __name__ == "__main__":
    state_dim, action_dim, additional_dim = 6, 3, 1
    feature_dim, latent_dim = 16, 8
    B, L = 2, 8

    key = jax.random.PRNGKey(0)
    kp, kh, kf, ks = jax.random.split(key, 4)

    raw_params = init_vae_params(kp, state_dim, action_dim, feature_dim, latent_dim, additional_dim)
    fused_params = fuse_vae_params(raw_params, latent_dim)

    history = jax.random.normal(kh, (B, L, state_dim + action_dim), jnp.float32)
    future = jax.random.normal(kf, (B, L, state_dim + action_dim), jnp.float32)

    fwd = jax.jit(vae_forward)
    h_latent, f_latent, (h_mu, h_log_std), (f_mu, f_log_std) = fwd(
        fused_params, history, future, ks)
    jax.block_until_ready((h_latent, f_latent, h_mu, h_log_std, f_mu, f_log_std))

    assert h_latent.shape == (B, latent_dim) and f_latent.shape == (B, latent_dim)
    assert h_mu.shape == (B, latent_dim) and f_log_std.shape == (B, latent_dim)

    # Check the fused-kernel encode path against the plain-JAX unfused reference.
    hist_m, fut_m = timestep_marking(history, future)
    r_h_mu, r_h_ls, r_f_mu, r_f_ls = _vae_encode_ref(raw_params, hist_m, fut_m)
    for got, ref in ((h_mu, r_h_mu), (h_log_std, r_h_ls), (f_mu, r_f_mu), (f_log_std, r_f_ls)):
        np.testing.assert_allclose(np.asarray(got), np.asarray(ref), rtol=3e-2, atol=3e-2)

    print("KERNEL_OK")
</pallas_src>

<mosaic_0001>
module attributes {stable_mosaic.version = 11 : i64} {
  func.func @_vae_fused_kernel(%arg0: i32, %arg1: memref<1x16x10xf32, #tpu.memory_space<vmem>>, %arg2: memref<1x16x10xf32, #tpu.memory_space<vmem>>, %arg3: memref<2x16xf32, #tpu.memory_space<vmem>>, %arg4: memref<2x32xf32, #tpu.memory_space<vmem>>, %arg5: memref<16x2xf32, #tpu.memory_space<vmem>>, %arg6: memref<10x16xf32, #tpu.memory_space<vmem>>, %arg7: memref<1x16xf32, #tpu.memory_space<vmem>>, %arg8: memref<16x16xf32, #tpu.memory_space<vmem>>, %arg9: memref<1x16xf32, #tpu.memory_space<vmem>>, %arg10: memref<16x16xf32, #tpu.memory_space<vmem>>, %arg11: memref<1x16xf32, #tpu.memory_space<vmem>>, %arg12: memref<26x192xf32, #tpu.memory_space<vmem>>, %arg13: memref<1x192xf32, #tpu.memory_space<vmem>>, %arg14: memref<192x192xf32, #tpu.memory_space<vmem>>, %arg15: memref<1x192xf32, #tpu.memory_space<vmem>>, %arg16: memref<192x16xf32, #tpu.memory_space<vmem>>, %arg17: memref<1x16xf32, #tpu.memory_space<vmem>>, %arg18: memref<26x192xf32, #tpu.memory_space<vmem>>, %arg19: memref<1x192xf32, #tpu.memory_space<vmem>>, %arg20: memref<192x192xf32, #tpu.memory_space<vmem>>, %arg21: memref<1x192xf32, #tpu.memory_space<vmem>>, %arg22: memref<192x16xf32, #tpu.memory_space<vmem>>, %arg23: memref<1x16xf32, #tpu.memory_space<vmem>>, %arg24: memref<1x2x32xf32, #tpu.memory_space<vmem>>) attributes {dimension_semantics = [#tpu.dimension_semantics<parallel>], iteration_bounds = array<i64: 1>, scalar_prefetch = 0 : i64, scratch_operands = 0 : i64, tpu.core_type = #tpu.core_type<tc>, window_params = [{transform_indices = @transform_0, window_bounds = array<i64: 1, 16, 10>}, {transform_indices = @transform_1, window_bounds = array<i64: 1, 16, 10>}, {pipeline_mode = #tpu.pipeline_mode<synchronous>, transform_indices = @transform_2, window_bounds = array<i64: 2, 16>}, {pipeline_mode = #tpu.pipeline_mode<synchronous>, transform_indices = @transform_3, window_bounds = array<i64: 2, 32>}, {pipeline_mode = #tpu.pipeline_mode<synchronous>, transform_indices = @transform_4, window_bounds = array<i64: 16, 2>}, {pipeline_mode = #tpu.pipeline_mode<synchronous>, transform_indices = @transform_5, window_bounds = array<i64: 10, 16>}, {pipeline_mode = #tpu.pipeline_mode<synchronous>, transform_indices = @transform_6, window_bounds = array<i64: 1, 16>}, {pipeline_mode = #tpu.pipeline_mode<synchronous>, transform_indices = @transform_7, window_bounds = array<i64: 16, 16>}, {pipeline_mode = #tpu.pipeline_mode<synchronous>, transform_indices = @transform_8, window_bounds = array<i64: 1, 16>}, {pipeline_mode = #tpu.pipeline_mode<synchronous>, transform_indices = @transform_9, window_bounds = array<i64: 16, 16>}, {pipeline_mode = #tpu.pipeline_mode<synchronous>, transform_indices = @transform_10, window_bounds = array<i64: 1, 16>}, {pipeline_mode = #tpu.pipeline_mode<synchronous>, transform_indices = @transform_11, window_bounds = array<i64: 26, 192>}, {pipeline_mode = #tpu.pipeline_mode<synchronous>, transform_indices = @transform_12, window_bounds = array<i64: 1, 192>}, {pipeline_mode = #tpu.pipeline_mode<synchronous>, transform_indices = @transform_13, window_bounds = array<i64: 192, 192>}, {pipeline_mode = #tpu.pipeline_mode<synchronous>, transform_indices = @transform_14, window_bounds = array<i64: 1, 192>}, {pipeline_mode = #tpu.pipeline_mode<synchronous>, transform_indices = @transform_15, window_bounds = array<i64: 192, 16>}, {pipeline_mode = #tpu.pipeline_mode<synchronous>, transform_indices = @transform_16, window_bounds = array<i64: 1, 16>}, {pipeline_mode = #tpu.pipeline_mode<synchronous>, transform_indices = @transform_17, window_bounds = array<i64: 26, 192>}, {pipeline_mode = #tpu.pipeline_mode<synchronous>, transform_indices = @transform_18, window_bounds = array<i64: 1, 192>}, {pipeline_mode = #tpu.pipeline_mode<synchronous>, transform_indices = @transform_19, window_bounds = array<i64: 192, 192>}, {pipeline_mode = #tpu.pipeline_mode<synchronous>, transform_indices = @transform_20, window_bounds = array<i64: 1, 192>}, {pipeline_mode = #tpu.pipeline_mode<synchronous>, transform_indices = @transform_21, window_bounds = array<i64: 192, 16>}, {pipeline_mode = #tpu.pipeline_mode<synchronous>, transform_indices = @transform_22, window_bounds = array<i64: 1, 16>}, {transform_indices = @transform_23, window_bounds = array<i64: 1, 2, 32>}]} {
    %c0 = arith.constant 0 : index
    %c0_0 = arith.constant 0 : index
    %c0_1 = arith.constant 0 : index
    %0 = vector.load %arg1[%c0, %c0_0, %c0_1] : memref<1x16x10xf32, #tpu.memory_space<vmem>>, vector<1x16x10xf32>
    %1 = vector.shape_cast %0 : vector<1x16x10xf32> to vector<16x10xf32>
    %c0_2 = arith.constant 0 : index
    %c0_3 = arith.constant 0 : index
    %c0_4 = arith.constant 0 : index
    %2 = vector.load %arg2[%c0_2, %c0_3, %c0_4] : memref<1x16x10xf32, #tpu.memory_space<vmem>>, vector<1x16x10xf32>
    %3 = vector.shape_cast %2 : vector<1x16x10xf32> to vector<16x10xf32>
    %c0_5 = arith.constant 0 : index
    %c0_6 = arith.constant 0 : index
    %4 = vector.load %arg3[%c0_5, %c0_6] : memref<2x16xf32, #tpu.memory_space<vmem>>, vector<2x16xf32>
    %c0_7 = arith.constant 0 : index
    %c0_8 = arith.constant 0 : index
    %5 = vector.load %arg4[%c0_7, %c0_8] : memref<2x32xf32, #tpu.memory_space<vmem>>, vector<2x32xf32>
    %c0_9 = arith.constant 0 : index
    %c0_10 = arith.constant 0 : index
    %6 = vector.load %arg5[%c0_9, %c0_10] : memref<16x2xf32, #tpu.memory_space<vmem>>, vector<16x2xf32>
    %7 = tpu.concatenate %1, %3 in 0 : vector<16x10xf32>, vector<16x10xf32> -> vector<32x10xf32>
    %c0_11 = arith.constant 0 : index
    %c0_12 = arith.constant 0 : index
    %8 = vector.load %arg6[%c0_11, %c0_12] : memref<10x16xf32, #tpu.memory_space<vmem>>, vector<10x16xf32>
    %cst = arith.constant dense<0.000000e+00> : vector<32x16xf32>
    %9 = tpu.matmul %7, %8, %cst {dimension_numbers = #tpu.dot_dimension_numbers<[1], [0], [0], [1], [0, 0, 1, 1], [], []>} : vector<32x10xf32>, vector<10x16xf32>, vector<32x16xf32> -> vector<32x16xf32>
    %c0_13 = arith.constant 0 : index
    %c0_14 = arith.constant 0 : index
    %10 = vector.load %arg7[%c0_13, %c0_14] : memref<1x16xf32, #tpu.memory_space<vmem>>, vector<1x16xf32>
    %11 = vector.broadcast %10 : vector<1x16xf32> to vector<32x16xf32>
    %12 = arith.addf %9, %11 : vector<32x16xf32>
    %cst_15 = arith.constant 0.000000e+00 : f32
    %13 = vector.broadcast %cst_15 : f32 to vector<32x16xf32>
    %14 = arith.maximumf %12, %13 : vector<32x16xf32>
    %c0_16 = arith.constant 0 : index
    %c0_17 = arith.constant 0 : index
    %15 = vector.load %arg8[%c0_16, %c0_17] : memref<16x16xf32, #tpu.memory_space<vmem>>, vector<16x16xf32>
    %cst_18 = arith.constant dense<0.000000e+00> : vector<32x16xf32>
    %16 = tpu.matmul %14, %15, %cst_18 {dimension_numbers = #tpu.dot_dimension_numbers<[1], [0], [0], [1], [0, 0, 1, 1], [], []>} : vector<32x16xf32>, vector<16x16xf32>, vector<32x16xf32> -> vector<32x16xf32>
    %c0_19 = arith.constant 0 : index
    %c0_20 = arith.constant 0 : index
    %17 = vector.load %arg9[%c0_19, %c0_20] : memref<1x16xf32, #tpu.memory_space<vmem>>, vector<1x16xf32>
    %18 = vector.broadcast %17 : vector<1x16xf32> to vector<32x16xf32>
    %19 = arith.addf %16, %18 : vector<32x16xf32>
    %cst_21 = arith.constant 0.000000e+00 : f32
    %20 = vector.broadcast %cst_21 : f32 to vector<32x16xf32>
    %21 = arith.maximumf %19, %20 : vector<32x16xf32>
    %cst_22 = arith.constant dense<0.000000e+00> : vector<2x16xf32>
    %22 = tpu.matmul %5, %21, %cst_22 {dimension_numbers = #tpu.dot_dimension_numbers<[1], [0], [0], [1], [0, 0, 1, 1], [], []>} : vector<2x32xf32>, vector<32x16xf32>, vector<2x16xf32> -> vector<2x16xf32>
    %c0_23 = arith.constant 0 : index
    %c0_24 = arith.constant 0 : index
    %23 = vector.load %arg10[%c0_23, %c0_24] : memref<16x16xf32, #tpu.memory_space<vmem>>, vector<16x16xf32>
    %cst_25 = arith.constant dense<0.000000e+00> : vector<2x16xf32>
    %24 = tpu.matmul %22, %23, %cst_25 {dimension_numbers = #tpu.dot_dimension_numbers<[1], [0], [0], [1], [0, 0, 1, 1], [], []>} : vector<2x16xf32>, vector<16x16xf32>, vector<2x16xf32> -> vector<2x16xf32>
    %c0_26 = arith.constant 0 : index
    %c0_27 = arith.constant 0 : index
    %25 = vector.load %arg11[%c0_26, %c0_27] : memref<1x16xf32, #tpu.memory_space<vmem>>, vector<1x16xf32>
    %26 = vector.broadcast %25 : vector<1x16xf32> to vector<2x16xf32>
    %27 = arith.addf %24, %26 : vector<2x16xf32>
    %cst_28 = arith.constant dense<0.000000e+00> : vector<16x16xf32>
    %28 = tpu.matmul %6, %27, %cst_28 {dimension_numbers = #tpu.dot_dimension_numbers<[1], [0], [0], [1], [0, 0, 1, 1], [], []>} : vector<16x2xf32>, vector<2x16xf32>, vector<16x16xf32> -> vector<16x16xf32>
    %29 = tpu.concatenate %28, %1 in 1 : vector<16x16xf32>, vector<16x10xf32> -> vector<16x26xf32>
    %c0_29 = arith.constant 0 : index
    %c0_30 = arith.constant 0 : index
    %30 = vector.load %arg12[%c0_29, %c0_30] : memref<26x192xf32, #tpu.memory_space<vmem>>, vector<26x192xf32>
    %cst_31 = arith.constant dense<0.000000e+00> : vector<16x192xf32>
    %31 = tpu.matmul %29, %30, %cst_31 {dimension_numbers = #tpu.dot_dimension_numbers<[1], [0], [0], [1], [0, 0, 1, 1], [], []>} : vector<16x26xf32>, vector<26x192xf32>, vector<16x192xf32> -> vector<16x192xf32>
    %c0_32 = arith.constant 0 : index
    %c0_33 = arith.constant 0 : index
    %32 = vector.load %arg13[%c0_32, %c0_33] : memref<1x192xf32, #tpu.memory_space<vmem>>, vector<1x192xf32>
    %33 = vector.broadcast %32 : vector<1x192xf32> to vector<16x192xf32>
    %34 = arith.addf %31, %33 : vector<16x192xf32>
    %cst_34 = arith.constant 0.000000e+00 : f32
    %35 = vector.broadcast %cst_34 : f32 to vector<16x192xf32>
    %36 = arith.maximumf %34, %35 : vector<16x192xf32>
    %c0_35 = arith.constant 0 : index
    %c0_36 = arith.constant 0 : index
    %37 = vector.load %arg14[%c0_35, %c0_36] : memref<192x192xf32, #tpu.memory_space<vmem>>, vector<192x192xf32>
    %cst_37 = arith.constant dense<0.000000e+00> : vector<16x192xf32>
    %38 = tpu.matmul %36, %37, %cst_37 {dimension_numbers = #tpu.dot_dimension_numbers<[1], [0], [0], [1], [0, 0, 1, 1], [], []>} : vector<16x192xf32>, vector<192x192xf32>, vector<16x192xf32> -> vector<16x192xf32>
    %c0_38 = arith.constant 0 : index
    %c0_39 = arith.constant 0 : index
    %39 = vector.load %arg15[%c0_38, %c0_39] : memref<1x192xf32, #tpu.memory_space<vmem>>, vector<1x192xf32>
    %40 = vector.broadcast %39 : vector<1x192xf32> to vector<16x192xf32>
    %41 = arith.addf %38, %40 : vector<16x192xf32>
    %cst_40 = arith.constant 0.000000e+00 : f32
    %42 = vector.broadcast %cst_40 : f32 to vector<16x192xf32>
    %43 = arith.maximumf %41, %42 : vector<16x192xf32>
    %c0_41 = arith.constant 0 : index
    %c0_42 = arith.constant 0 : index
    %44 = vector.load %arg16[%c0_41, %c0_42] : memref<192x16xf32, #tpu.memory_space<vmem>>, vector<192x16xf32>
    %cst_43 = arith.constant dense<0.000000e+00> : vector<16x16xf32>
    %45 = tpu.matmul %43, %44, %cst_43 {dimension_numbers = #tpu.dot_dimension_numbers<[1], [0], [0], [1], [0, 0, 1, 1], [], []>} : vector<16x192xf32>, vector<192x16xf32>, vector<16x16xf32> -> vector<16x16xf32>
    %c0_44 = arith.constant 0 : index
    %c0_45 = arith.constant 0 : index
    %46 = vector.load %arg17[%c0_44, %c0_45] : memref<1x16xf32, #tpu.memory_space<vmem>>, vector<1x16xf32>
    %47 = vector.broadcast %46 : vector<1x16xf32> to vector<16x16xf32>
    %48 = arith.addf %45, %47 : vector<16x16xf32>
    %49 = tpu.iota {dimensions = array<i32: 1>} : vector<16x16xi32>
    %c8_i32 = arith.constant 8 : i32
    %50 = vector.broadcast %c8_i32 : i32 to vector<16x16xi32>
    %51 = arith.cmpi sge, %49, %50 : vector<16x16xi32>
    %cst_46 = arith.constant -4.000000e+00 : f32
    %cst_47 = arith.constant 1.500000e+01 : f32
    %52 = vector.broadcast %cst_46 : f32 to vector<16x16xf32>
    %53 = arith.maximumf %52, %48 : vector<16x16xf32>
    %54 = vector.broadcast %cst_47 : f32 to vector<16x16xf32>
    %55 = arith.minimumf %54, %53 : vector<16x16xf32>
    %56 = arith.select %51, %55, %48 : vector<16x16xi1>, vector<16x16xf32>
    %cst_48 = arith.constant dense<0.000000e+00> : vector<2x16xf32>
    %57 = tpu.matmul %4, %56, %cst_48 {dimension_numbers = #tpu.dot_dimension_numbers<[1], [0], [0], [1], [0, 0, 1, 1], [], []>} : vector<2x16xf32>, vector<16x16xf32>, vector<2x16xf32> -> vector<2x16xf32>
    %58 = tpu.concatenate %28, %3 in 1 : vector<16x16xf32>, vector<16x10xf32> -> vector<16x26xf32>
    %c0_49 = arith.constant 0 : index
    %c0_50 = arith.constant 0 : index
    %59 = vector.load %arg18[%c0_49, %c0_50] : memref<26x192xf32, #tpu.memory_space<vmem>>, vector<26x192xf32>
    %cst_51 = arith.constant dense<0.000000e+00> : vector<16x192xf32>
    %60 = tpu.matmul %58, %59, %cst_51 {dimension_numbers = #tpu.dot_dimension_numbers<[1], [0], [0], [1], [0, 0, 1, 1], [], []>} : vector<16x26xf32>, vector<26x192xf32>, vector<16x192xf32> -> vector<16x192xf32>
    %c0_52 = arith.constant 0 : index
    %c0_53 = arith.constant 0 : index
    %61 = vector.load %arg19[%c0_52, %c0_53] : memref<1x192xf32, #tpu.memory_space<vmem>>, vector<1x192xf32>
    %62 = vector.broadcast %61 : vector<1x192xf32> to vector<16x192xf32>
    %63 = arith.addf %60, %62 : vector<16x192xf32>
    %cst_54 = arith.constant 0.000000e+00 : f32
    %64 = vector.broadcast %cst_54 : f32 to vector<16x192xf32>
    %65 = arith.maximumf %63, %64 : vector<16x192xf32>
    %c0_55 = arith.constant 0 : index
    %c0_56 = arith.constant 0 : index
    %66 = vector.load %arg20[%c0_55, %c0_56] : memref<192x192xf32, #tpu.memory_space<vmem>>, vector<192x192xf32>
    %cst_57 = arith.constant dense<0.000000e+00> : vector<16x192xf32>
    %67 = tpu.matmul %65, %66, %cst_57 {dimension_numbers = #tpu.dot_dimension_numbers<[1], [0], [0], [1], [0, 0, 1, 1], [], []>} : vector<16x192xf32>, vector<192x192xf32>, vector<16x192xf32> -> vector<16x192xf32>
    %c0_58 = arith.constant 0 : index
    %c0_59 = arith.constant 0 : index
    %68 = vector.load %arg21[%c0_58, %c0_59] : memref<1x192xf32, #tpu.memory_space<vmem>>, vector<1x192xf32>
    %69 = vector.broadcast %68 : vector<1x192xf32> to vector<16x192xf32>
    %70 = arith.addf %67, %69 : vector<16x192xf32>
    %cst_60 = arith.constant 0.000000e+00 : f32
    %71 = vector.broadcast %cst_60 : f32 to vector<16x192xf32>
    %72 = arith.maximumf %70, %71 : vector<16x192xf32>
    %c0_61 = arith.constant 0 : index
    %c0_62 = arith.constant 0 : index
    %73 = vector.load %arg22[%c0_61, %c0_62] : memref<192x16xf32, #tpu.memory_space<vmem>>, vector<192x16xf32>
    %cst_63 = arith.constant dense<0.000000e+00> : vector<16x16xf32>
    %74 = tpu.matmul %72, %73, %cst_63 {dimension_numbers = #tpu.dot_dimension_numbers<[1], [0], [0], [1], [0, 0, 1, 1], [], []>} : vector<16x192xf32>, vector<192x16xf32>, vector<16x16xf32> -> vector<16x16xf32>
    %c0_64 = arith.constant 0 : index
    %c0_65 = arith.constant 0 : index
    %75 = vector.load %arg23[%c0_64, %c0_65] : memref<1x16xf32, #tpu.memory_space<vmem>>, vector<1x16xf32>
    %76 = vector.broadcast %75 : vector<1x16xf32> to vector<16x16xf32>
    %77 = arith.addf %74, %76 : vector<16x16xf32>
    %78 = tpu.iota {dimensions = array<i32: 1>} : vector<16x16xi32>
    %c8_i32_66 = arith.constant 8 : i32
    %79 = vector.broadcast %c8_i32_66 : i32 to vector<16x16xi32>
    %80 = arith.cmpi sge, %78, %79 : vector<16x16xi32>
    %cst_67 = arith.constant -4.000000e+00 : f32
    %cst_68 = arith.constant 1.500000e+01 : f32
    %81 = vector.broadcast %cst_67 : f32 to vector<16x16xf32>
    %82 = arith.maximumf %81, %77 : vector<16x16xf32>
    %83 = vector.broadcast %cst_68 : f32 to vector<16x16xf32>
    %84 = arith.minimumf %83, %82 : vector<16x16xf32>
    %85 = arith.select %80, %84, %77 : vector<16x16xi1>, vector<16x16xf32>
    %cst_69 = arith.constant dense<0.000000e+00> : vector<2x16xf32>
    %86 = tpu.matmul %4, %85, %cst_69 {dimension_numbers = #tpu.dot_dimension_numbers<[1], [0], [0], [1], [0, 0, 1, 1], [], []>} : vector<2x16xf32>, vector<16x16xf32>, vector<2x16xf32> -> vector<2x16xf32>
    %87 = tpu.concatenate %57, %86 in 1 : vector<2x16xf32>, vector<2x16xf32> -> vector<2x32xf32>
    %c0_70 = arith.constant 0 : index
    %c0_71 = arith.constant 0 : index
    %c0_72 = arith.constant 0 : index
    %88 = vector.load %arg24[%c0_70, %c0_71, %c0_72] : memref<1x2x32xf32, #tpu.memory_space<vmem>>, vector<1x2x32xf32>
    %89 = vector.shape_cast %88 : vector<1x2x32xf32> to vector<2x32xf32>
    %90 = vector.shape_cast %87 : vector<2x32xf32> to vector<1x2x32xf32>
    tpu.vector_store %arg24[%c0_70, %c0_71, %c0_72], %90 {strides = array<i32>} : memref<1x2x32xf32, #tpu.memory_space<vmem>>, vector<1x2x32xf32>,
    return
  }
  func.func @transform_0(%arg0: i32) -> (i32, i32, i32) {
    %c0_i32 = arith.constant 0 : i32
    %c0_i32_0 = arith.constant 0 : i32
    %c0_i32_1 = arith.constant 0 : i32
    return %arg0, %c0_i32, %c0_i32_0 : i32, i32, i32
  }
  func.func @transform_1(%arg0: i32) -> (i32, i32, i32) {
    %c0_i32 = arith.constant 0 : i32
    %c0_i32_0 = arith.constant 0 : i32
    %c0_i32_1 = arith.constant 0 : i32
    return %arg0, %c0_i32, %c0_i32_0 : i32, i32, i32
  }
  func.func @transform_2(%arg0: i32) -> (i32, i32) {
    %c0_i32 = arith.constant 0 : i32
    %c0_i32_0 = arith.constant 0 : i32
    %c0_i32_1 = arith.constant 0 : i32
    return %c0_i32, %c0_i32_0 : i32, i32
  }
  func.func @transform_3(%arg0: i32) -> (i32, i32) {
    %c0_i32 = arith.constant 0 : i32
    %c0_i32_0 = arith.constant 0 : i32
    %c0_i32_1 = arith.constant 0 : i32
    return %c0_i32, %c0_i32_0 : i32, i32
  }
  func.func @transform_4(%arg0: i32) -> (i32, i32) {
    %c0_i32 = arith.constant 0 : i32
    %c0_i32_0 = arith.constant 0 : i32
    %c0_i32_1 = arith.constant 0 : i32
    return %c0_i32, %c0_i32_0 : i32, i32
  }
  func.func @transform_5(%arg0: i32) -> (i32, i32) {
    %c0_i32 = arith.constant 0 : i32
    %c0_i32_0 = arith.constant 0 : i32
    %c0_i32_1 = arith.constant 0 : i32
    return %c0_i32, %c0_i32_0 : i32, i32
  }
  func.func @transform_6(%arg0: i32) -> (i32, i32) {
    %c0_i32 = arith.constant 0 : i32
    %c0_i32_0 = arith.constant 0 : i32
    %c0_i32_1 = arith.constant 0 : i32
    return %c0_i32, %c0_i32_0 : i32, i32
  }
  func.func @transform_7(%arg0: i32) -> (i32, i32) {
    %c0_i32 = arith.constant 0 : i32
    %c0_i32_0 = arith.constant 0 : i32
    %c0_i32_1 = arith.constant 0 : i32
    return %c0_i32, %c0_i32_0 : i32, i32
  }
  func.func @transform_8(%arg0: i32) -> (i32, i32) {
    %c0_i32 = arith.constant 0 : i32
    %c0_i32_0 = arith.constant 0 : i32
    %c0_i32_1 = arith.constant 0 : i32
    return %c0_i32, %c0_i32_0 : i32, i32
  }
  func.func @transform_9(%arg0: i32) -> (i32, i32) {
    %c0_i32 = arith.constant 0 : i32
    %c0_i32_0 = arith.constant 0 : i32
    %c0_i32_1 = arith.constant 0 : i32
    return %c0_i32, %c0_i32_0 : i32, i32
  }
  func.func @transform_10(%arg0: i32) -> (i32, i32) {
    %c0_i32 = arith.constant 0 : i32
    %c0_i32_0 = arith.constant 0 : i32
    %c0_i32_1 = arith.constant 0 : i32
    return %c0_i32, %c0_i32_0 : i32, i32
  }
  func.func @transform_11(%arg0: i32) -> (i32, i32) {
    %c0_i32 = arith.constant 0 : i32
    %c0_i32_0 = arith.constant 0 : i32
    %c0_i32_1 = arith.constant 0 : i32
    return %c0_i32, %c0_i32_0 : i32, i32
  }
  func.func @transform_12(%arg0: i32) -> (i32, i32) {
    %c0_i32 = arith.constant 0 : i32
    %c0_i32_0 = arith.constant 0 : i32
    %c0_i32_1 = arith.constant 0 : i32
    return %c0_i32, %c0_i32_0 : i32, i32
  }
  func.func @transform_13(%arg0: i32) -> (i32, i32) {
    %c0_i32 = arith.constant 0 : i32
    %c0_i32_0 = arith.constant 0 : i32
    %c0_i32_1 = arith.constant 0 : i32
    return %c0_i32, %c0_i32_0 : i32, i32
  }
  func.func @transform_14(%arg0: i32) -> (i32, i32) {
    %c0_i32 = arith.constant 0 : i32
    %c0_i32_0 = arith.constant 0 : i32
    %c0_i32_1 = arith.constant 0 : i32
    return %c0_i32, %c0_i32_0 : i32, i32
  }
  func.func @transform_15(%arg0: i32) -> (i32, i32) {
    %c0_i32 = arith.constant 0 : i32
    %c0_i32_0 = arith.constant 0 : i32
    %c0_i32_1 = arith.constant 0 : i32
    return %c0_i32, %c0_i32_0 : i32, i32
  }
  func.func @transform_16(%arg0: i32) -> (i32, i32) {
    %c0_i32 = arith.constant 0 : i32
    %c0_i32_0 = arith.constant 0 : i32
    %c0_i32_1 = arith.constant 0 : i32
    return %c0_i32, %c0_i32_0 : i32, i32
  }
  func.func @transform_17(%arg0: i32) -> (i32, i32) {
    %c0_i32 = arith.constant 0 : i32
    %c0_i32_0 = arith.constant 0 : i32
    %c0_i32_1 = arith.constant 0 : i32
    return %c0_i32, %c0_i32_0 : i32, i32
  }
  func.func @transform_18(%arg0: i32) -> (i32, i32) {
    %c0_i32 = arith.constant 0 : i32
    %c0_i32_0 = arith.constant 0 : i32
    %c0_i32_1 = arith.constant 0 : i32
    return %c0_i32, %c0_i32_0 : i32, i32
  }
  func.func @transform_19(%arg0: i32) -> (i32, i32) {
    %c0_i32 = arith.constant 0 : i32
    %c0_i32_0 = arith.constant 0 : i32
    %c0_i32_1 = arith.constant 0 : i32
    return %c0_i32, %c0_i32_0 : i32, i32
  }
  func.func @transform_20(%arg0: i32) -> (i32, i32) {
    %c0_i32 = arith.constant 0 : i32
    %c0_i32_0 = arith.constant 0 : i32
    %c0_i32_1 = arith.constant 0 : i32
    return %c0_i32, %c0_i32_0 : i32, i32
  }
  func.func @transform_21(%arg0: i32) -> (i32, i32) {
    %c0_i32 = arith.constant 0 : i32
    %c0_i32_0 = arith.constant 0 : i32
    %c0_i32_1 = arith.constant 0 : i32
    return %c0_i32, %c0_i32_0 : i32, i32
  }
  func.func @transform_22(%arg0: i32) -> (i32, i32) {
    %c0_i32 = arith.constant 0 : i32
    %c0_i32_0 = arith.constant 0 : i32
    %c0_i32_1 = arith.constant 0 : i32
    return %c0_i32, %c0_i32_0 : i32, i32
  }
  func.func @transform_23(%arg0: i32) -> (i32, i32, i32) {
    %c0_i32 = arith.constant 0 : i32
    %c0_i32_0 = arith.constant 0 : i32
    %c0_i32_1 = arith.constant 0 : i32
    return %arg0, %c0_i32, %c0_i32_0 : i32, i32, i32
  }
}

</mosaic_0001>

<llo_original>
// kernel: vae_forward.3
$region0: #{vae_forward.3}
  #allocation0 [shape = 'u32[]', space=smem, size = 0x4, offset = 0x4, fixed_abs, tag = 'smem constant byte address 0x4 - core index']
  #allocation1 [shape = 'u32[72,128]{1,0:T(1,128)}', space=vmem, size = 0x9000, scoped, tag = 'internal scratch']
  %s0 = inlined_call_operand.vmem [shape: f32[1,16,10], index: 0, kind: input, shape index: {}]
  %s1 = inlined_call_operand.vmem [shape: f32[1,16,10], index: 1, kind: input, shape index: {}]
  %s2 = inlined_call_operand.vmem [shape: f32[2,16], index: 2, kind: input, shape index: {}]
  %s3 = inlined_call_operand.vmem [shape: f32[2,32], index: 3, kind: input, shape index: {}]
  %s4 = inlined_call_operand.vmem [shape: f32[16,2], index: 4, kind: input, shape index: {}]
  %s5 = inlined_call_operand.vmem [shape: f32[10,16], index: 5, kind: input, shape index: {}]
  %s6 = inlined_call_operand.vmem [shape: f32[1,16], index: 6, kind: input, shape index: {}]
  %s7 = inlined_call_operand.vmem [shape: f32[16,16], index: 7, kind: input, shape index: {}]
  %s8 = inlined_call_operand.vmem [shape: f32[1,16], index: 8, kind: input, shape index: {}]
  %s9 = inlined_call_operand.vmem [shape: f32[16,16], index: 9, kind: input, shape index: {}]
  %s10 = inlined_call_operand.vmem [shape: f32[1,16], index: 10, kind: input, shape index: {}]
  %s11 = inlined_call_operand.vmem [shape: f32[26,192], index: 11, kind: input, shape index: {}]
  %s12 = inlined_call_operand.vmem [shape: f32[1,192], index: 12, kind: input, shape index: {}]
  %s13 = inlined_call_operand.vmem [shape: f32[192,192], index: 13, kind: input, shape index: {}]
  %s14 = inlined_call_operand.vmem [shape: f32[1,192], index: 14, kind: input, shape index: {}]
  %s15 = inlined_call_operand.vmem [shape: f32[192,16], index: 15, kind: input, shape index: {}]
  %s16 = inlined_call_operand.vmem [shape: f32[1,16], index: 16, kind: input, shape index: {}]
  %s17 = inlined_call_operand.hbm [shape: f32[26,192], index: 17, kind: input, shape index: {}]
  %s18 = inlined_call_operand.vmem [shape: f32[1,192], index: 18, kind: input, shape index: {}]
  %s19 = inlined_call_operand.hbm [shape: f32[192,192], index: 19, kind: input, shape index: {}]
  %s20 = inlined_call_operand.vmem [shape: f32[1,192], index: 20, kind: input, shape index: {}]
  %s21 = inlined_call_operand.vmem [shape: f32[192,16], index: 21, kind: input, shape index: {}]
  %s22 = inlined_call_operand.vmem [shape: f32[1,16], index: 22, kind: input, shape index: {}]
  %s23 = inlined_call_operand.vmem [shape: f32[1,2,32], index: 23, kind: output, shape index: {}]
  %s24 = sld [smem:[#allocation0]]
  $region110: #{vae_forward.3} parent=0
    _
  %s26 = ssub.s32 1, %s24
  %s27 = scalar_select 0, %s26, %s24
  $region1: #{vae_forward.3} parent=0
    #allocation2 [shape = 'u8[32768]{0}', space=vmem, size = 0x8000, scoped, tag = 'input window, operand 17, single buffered']
    #allocation3 [shape = 's32[1]{0}', space=sflag, size = 0x4, scoped, tag = 'scoped memory for vae_forward.3']
    #allocation4 [shape = 'u8[196608]{0}', space=vmem, size = 0x30000, scoped, tag = 'input window, operand 19, single buffered']
    #allocation5 [shape = 's32[1]{0}', space=sflag, size = 0x4, scoped, tag = 'scoped memory for vae_forward.3']
    %28 = vsyncpa [#allocation3], 0
    %29 = vsyncpa [#allocation5], 0
    // Predicated region
    $region2: #{vae_forward.3} parent=1 // pred_check
      _
    $region3: #{vae_forward.3} parent=1 // pred_check_branch
      %31 = sbr.rel (0) target = $region5
    $region4: #{vae_forward.3} parent=1 // pred_region
      _
    $region5: #{vae_forward.3} parent=1 // pred_fallthru
      _
    // Predicated region
    $region6: #{vae_forward.3} parent=1 // pred_check
      _
    $region7: #{vae_forward.3} parent=1 // pred_check_branch
      %33 = sbr.rel (0) target = $region9
    $region8: #{vae_forward.3} parent=1 // pred_region
      _
    $region9: #{vae_forward.3} parent=1 // pred_fallthru
      _
    // Predicated region
    $region10: #{vae_forward.3} parent=1 // pred_check
      _
    $region11: #{vae_forward.3} parent=1 // pred_check_branch
      %35 = sbr.rel (0) target = $region13
    $region12: #{vae_forward.3} parent=1 // pred_region
      _
    $region13: #{vae_forward.3} parent=1 // pred_fallthru
      _
    // Predicated region
    $region14: #{vae_forward.3} parent=1 // pred_check
      _
    $region15: #{vae_forward.3} parent=1 // pred_check_branch
      %37 = sbr.rel (0) target = $region17
    $region16: #{vae_forward.3} parent=1 // pred_region
      _
    $region17: #{vae_forward.3} parent=1 // pred_fallthru
      _
    // Predicated region
    $region18: #{vae_forward.3} parent=1 // pred_check
      _
    $region19: #{vae_forward.3} parent=1 // pred_check_branch
      %39 = sbr.rel (0) target = $region21
    $region20: #{vae_forward.3} parent=1 // pred_region
      _
    $region21: #{vae_forward.3} parent=1 // pred_fallthru
      _
    // Predicated region
    $region22: #{vae_forward.3} parent=1 // pred_check
      _
    $region23: #{vae_forward.3} parent=1 // pred_check_branch
      %41 = sbr.rel (0) target = $region25
    $region24: #{vae_forward.3} parent=1 // pred_region
      _
    $region25: #{vae_forward.3} parent=1 // pred_fallthru
      _
    // Predicated region
    $region26: #{vae_forward.3} parent=1 // pred_check
      _
    $region27: #{vae_forward.3} parent=1 // pred_check_branch
      %43 = sbr.rel (0) target = $region29
    $region28: #{vae_forward.3} parent=1 // pred_region
      _
    $region29: #{vae_forward.3} parent=1 // pred_fallthru
      _
    // Predicated region
    $region30: #{vae_forward.3} parent=1 // pred_check
      _
    $region31: #{vae_forward.3} parent=1 // pred_check_branch
      %45 = sbr.rel (0) target = $region33
    $region32: #{vae_forward.3} parent=1 // pred_region
      _
    $region33: #{vae_forward.3} parent=1 // pred_fallthru
      _
    // Predicated region
    $region34: #{vae_forward.3} parent=1 // pred_check
      _
    $region35: #{vae_forward.3} parent=1 // pred_check_branch
      %47 = sbr.rel (0) target = $region37
    $region36: #{vae_forward.3} parent=1 // pred_region
      _
    $region37: #{vae_forward.3} parent=1 // pred_fallthru
      _
    // Predicated region
    $region38: #{vae_forward.3} parent=1 // pred_check
      _
    $region39: #{vae_forward.3} parent=1 // pred_check_branch
      %49 = sbr.rel (0) target = $region41
    $region40: #{vae_forward.3} parent=1 // pred_region
      _
    $region41: #{vae_forward.3} parent=1 // pred_fallthru
      _
    // Predicated region
    $region42: #{vae_forward.3} parent=1 // pred_check
      _
    $region43: #{vae_forward.3} parent=1 // pred_check_branch
      %51 = sbr.rel (0) target = $region45
    $region44: #{vae_forward.3} parent=1 // pred_region
      _
    $region45: #{vae_forward.3} parent=1 // pred_fallthru
      _
    // Predicated region
    $region46: #{vae_forward.3} parent=1 // pred_check
      _
    $region47: #{vae_forward.3} parent=1 // pred_check_branch
      %53 = sbr.rel (0) target = $region49
    $region48: #{vae_forward.3} parent=1 // pred_region
      _
    $region49: #{vae_forward.3} parent=1 // pred_fallthru
      _
    // Predicated region
    $region50: #{vae_forward.3} parent=1 // pred_check
      _
    $region51: #{vae_forward.3} parent=1 // pred_check_branch
      %55 = sbr.rel (0) target = $region53
    $region52: #{vae_forward.3} parent=1 // pred_region
      _
    $region53: #{vae_forward.3} parent=1 // pred_fallthru
      _
    // Predicated region
    $region54: #{vae_forward.3} parent=1 // pred_check
      _
    $region55: #{vae_forward.3} parent=1 // pred_check_branch
      %57 = sbr.rel (0) target = $region57
    $region56: #{vae_forward.3} parent=1 // pred_region
      _
    $region57: #{vae_forward.3} parent=1 // pred_fallthru
      _
    // Predicated region
    $region58: #{vae_forward.3} parent=1 // pred_check
      _
    $region59: #{vae_forward.3} parent=1 // pred_check_branch
      %59 = sbr.rel (0) target = $region61
    $region60: #{vae_forward.3} parent=1 // pred_region
      _
    $region61: #{vae_forward.3} parent=1 // pred_fallthru
      _
    // Predicated region
    $region62: #{vae_forward.3} parent=1 // pred_check
      _
    $region63: #{vae_forward.3} parent=1 // pred_check_branch
      %61 = sbr.rel (0) target = $region65
    $region64: #{vae_forward.3} parent=1 // pred_region
      _
    $region65: #{vae_forward.3} parent=1 // pred_fallthru
      _
    // Predicated region
    $region66: #{vae_forward.3} parent=1 // pred_check
      _
    $region67: #{vae_forward.3} parent=1 // pred_check_branch
      %63 = sbr.rel (0) target = $region69
    $region68: #{vae_forward.3} parent=1 // pred_region
      _
    $region69: #{vae_forward.3} parent=1 // pred_fallthru
      _
    // Predicated region
    $region70: #{vae_forward.3} parent=1 // pred_check
      _
    $region71: #{vae_forward.3} parent=1 // pred_check_branch
      %65 = sbr.rel (0) target = $region73
    $region72: #{vae_forward.3} parent=1 // pred_region
      %67 = vsyncadd [#allocation3], 0
      %s68 = sshll.u32 %s17, 4
      %s69 = int_to_ptr.hbm [resolvable:$true] %s68
      %s70 = sshll.u32 [#allocation2], 4
      %s71 = int_to_ptr.vmem [resolvable:$true] %s70
      %76 = dma.hbm_to_vmem [thread:$0]  %s69, 1024, %s71, [#allocation3], 256, 256, 16
    $region73: #{vae_forward.3} parent=1 // pred_fallthru
      _
    // Predicated region
    $region74: #{vae_forward.3} parent=1 // pred_check
      _
    $region75: #{vae_forward.3} parent=1 // pred_check_branch
      %78 = sbr.rel (0) target = $region77
    $region76: #{vae_forward.3} parent=1 // pred_region
      _
    $region77: #{vae_forward.3} parent=1 // pred_fallthru
      _
    // Predicated region
    $region78: #{vae_forward.3} parent=1 // pred_check
      _
    $region79: #{vae_forward.3} parent=1 // pred_check_branch
      %80 = sbr.rel (0) target = $region81
    $region80: #{vae_forward.3} parent=1 // pred_region
      %82 = vsyncadd [#allocation5], 0
      %s83 = sshll.u32 %s19, 4
      %s84 = int_to_ptr.hbm [resolvable:$true] %s83
      %s85 = sshll.u32 [#allocation4], 4
      %s86 = int_to_ptr.vmem [resolvable:$true] %s85
      %91 = dma.hbm_to_vmem [thread:$0]  %s84, 6144, %s86, [#allocation5], 256, 256, 16
    $region81: #{vae_forward.3} parent=1 // pred_fallthru
      _
    // Predicated region
    $region82: #{vae_forward.3} parent=1 // pred_check
      _
    $region83: #{vae_forward.3} parent=1 // pred_check_branch
      %93 = sbr.rel (0) target = $region85
    $region84: #{vae_forward.3} parent=1 // pred_region
      _
    $region85: #{vae_forward.3} parent=1 // pred_fallthru
      _
    // Predicated region
    $region86: #{vae_forward.3} parent=1 // pred_check
      _
    $region87: #{vae_forward.3} parent=1 // pred_check_branch
      %95 = sbr.rel (0) target = $region89
    $region88: #{vae_forward.3} parent=1 // pred_region
      _
    $region89: #{vae_forward.3} parent=1 // pred_fallthru
      _
    // Predicated region
    $region90: #{vae_forward.3} parent=1 // pred_check
      _
    $region91: #{vae_forward.3} parent=1 // pred_check_branch
      %97 = sbr.rel (0) target = $region93
    $region92: #{vae_forward.3} parent=1 // pred_region
      _
    $region93: #{vae_forward.3} parent=1 // pred_fallthru
      _
    // Predicated region
    $region94: #{vae_forward.3} parent=1 // pred_check
      _
    $region95: #{vae_forward.3} parent=1 // pred_check_branch
      %99 = sbr.rel (0) target = $region97
    $region96: #{vae_forward.3} parent=1 // pred_region
      %101 = dma.done [#allocation3], 1024
    $region97: #{vae_forward.3} parent=1 // pred_fallthru
      _
    // Predicated region
    $region98: #{vae_forward.3} parent=1 // pred_check
      _
    $region99: #{vae_forward.3} parent=1 // pred_check_branch
      %103 = sbr.rel (0) target = $region101
    $region100: #{vae_forward.3} parent=1 // pred_region
      %105 = dma.done [#allocation5], 6144
    $region101: #{vae_forward.3} parent=1 // pred_fallthru
      _
    %v106 = vld [vmem:[%s0] sm:$0xff]
    %v107 = vld [vmem:[%s0 + $0x8] sm:$0xff]
    %v108 = vld [vmem:[%s1] sm:$0xff]
    %v109 = vld [vmem:[%s1 + $0x8] sm:$0xff]
    %v110 = vld [vmem:[%s2] sm:$0x3]
    %v111 = vld [vmem:[%s3] sm:$0x3]
    %v112 = vld [vmem:[%s4] sm:$0xff]
    %v113 = vld [vmem:[%s4 + $0x8] sm:$0xff]
    %v114 = vld [vmem:[%s5] sm:$0xff]
    %v115 = vld [vmem:[%s5 + $0x8] sm:$0x3]
    %v116 = vld [vmem:[%s6] sm:$0x1]
    %v118 = vperm.slane %v116, 0
    %vm120 = vcmask 80896
    %v122 = vsel %vm120, %v106, 0
    %v125 = vsel %vm120, %v107, 0
    %v128 = vsel %vm120, %v108, 0
    %v131 = vsel %vm120, %v109, 0
    %vm133 = vcmask 1041408
    %v135 = vsel %vm133, %v115, 0
    %137 = vmatpush.msra.mxu0 0.0
    %138 = vmatpush.msra.mxu0 0.0
    %139 = vmatpush.msra.mxu0 0.0
    %140 = vmatpush.msra.mxu0 0.0
    %141 = vmatpush.msra.mxu0 0.0
    %142 = vmatpush.msra.mxu0 0.0
    %143 = vmatpush.msra.mxu0 0.0
    %144 = vmatpush.msra.mxu0 0.0
    %145 = vmatpush.msra.mxu0 0.0
    %146 = vmatpush.msra.mxu0 0.0
    %147 = vmatpush.msra.mxu0 0.0
    %148 = vmatpush.msra.mxu0 0.0
    %149 = vmatpush.msra.mxu0 0.0
    %150 = vmatpush.msra.mxu0 0.0
    %151 = vmatpush.msra.mxu0 %v135
    %152 = vmatpush.msra.mxu0 %v114
    %153 = vmatmul.f32.gmra.mxu0 %v122
    %v154 = vpop.f32.mrf.mxu0
    %v155 = vadd.f32 %v118, %v154
    %156 = vmatmul.f32.gmra.mxu0 %v125
    %v157 = vpop.f32.mrf.mxu0
    %v158 = vadd.f32 %v118, %v157
    %159 = vmatmul.f32.gmra.mxu0 %v128
    %v160 = vpop.f32.mrf.mxu0
    %v161 = vadd.f32 %v118, %v160
    %162 = vmatmul.f32.gmra.mxu0 %v131
    %v163 = vpop.f32.mrf.mxu0
    %v164 = vadd.f32 %v118, %v163
    %165 = vdwg.mxu0
    %v166 = vmax.f32 %v155, 0.0
    %v167 = vmax.f32 %v158, 0.0
    %v168 = vmax.f32 %v161, 0.0
    %v169 = vmax.f32 %v164, 0.0
    %v170 = vld [vmem:[%s7] sm:$0xff]
    %v171 = vld [vmem:[%s7 + $0x8] sm:$0xff]
    %v172 = vld [vmem:[%s8] sm:$0x1]
    %v174 = vperm.slane %v172, 0
    %vm176 = vcmask 130048
    %v178 = vsel %vm176, %v166, 0
    %v181 = vsel %vm176, %v167, 0
    %v184 = vsel %vm176, %v168, 0
    %v187 = vsel %vm176, %v169, 0
    %189 = vmatpush.msra.mxu0 0.0
    %190 = vmatpush.msra.mxu0 0.0
    %191 = vmatpush.msra.mxu0 0.0
    %192 = vmatpush.msra.mxu0 0.0
    %193 = vmatpush.msra.mxu0 0.0
    %194 = vmatpush.msra.mxu0 0.0
    %195 = vmatpush.msra.mxu0 0.0
    %196 = vmatpush.msra.mxu0 0.0
    %197 = vmatpush.msra.mxu0 0.0
    %198 = vmatpush.msra.mxu0 0.0
    %199 = vmatpush.msra.mxu0 0.0
    %200 = vmatpush.msra.mxu0 0.0
    %201 = vmatpush.msra.mxu0 0.0
    %202 = vmatpush.msra.mxu0 0.0
    %203 = vmatpush.msra.mxu0 %v171
    %204 = vmatpush.msra.mxu0 %v170
    %205 = vmatmul.f32.gmra.mxu0 %v178
    %v206 = vpop.f32.mrf.mxu0
    %v207 = vadd.f32 %v174, %v206
    %208 = vmatmul.f32.gmra.mxu0 %v181
    %v209 = vpop.f32.mrf.mxu0
    %v210 = vadd.f32 %v174, %v209
    %211 = vmatmul.f32.gmra.mxu0 %v184
    %v212 = vpop.f32.mrf.mxu0
    %v213 = vadd.f32 %v174, %v212
    %214 = vmatmul.f32.gmra.mxu0 %v187
    %v215 = vpop.f32.mrf.mxu0
    %v216 = vadd.f32 %v174, %v215
    %217 = vdwg.mxu0
    %v218 = vmax.f32 %v207, 0.0
    %v219 = vmax.f32 %v210, 0.0
    %v220 = vmax.f32 %v213, 0.0
    %v221 = vmax.f32 %v216, 0.0
    %vm222 = vcmask 261120
    %v224 = vsel %vm222, %v111, 0
    %226 = vmatpush.msra.mxu0 0.0
    %227 = vmatpush.msra.mxu0 0.0
    %228 = vmatpush.msra.mxu0 0.0
    %229 = vmatpush.msra.mxu0 0.0
    %230 = vmatpush.msra.mxu0 0.0
    %231 = vmatpush.msra.mxu0 0.0
    %232 = vmatpush.msra.mxu0 0.0
    %233 = vmatpush.msra.mxu0 0.0
    %234 = vmatpush.msra.mxu0 0.0
    %235 = vmatpush.msra.mxu0 0.0
    %236 = vmatpush.msra.mxu0 0.0
    %237 = vmatpush.msra.mxu0 0.0
    %238 = vmatpush.msra.mxu0 %v221
    %239 = vmatpush.msra.mxu0 %v220
    %240 = vmatpush.msra.mxu0 %v219
    %241 = vmatpush.msra.mxu0 %v218
    %242 = vmatmul.f32.gmra.mxu0 %v224
    %v243 = vpop.f32.mrf.mxu0
    %v244 = vadd.f32 0.0, %v243
    %245 = vdwg.mxu0
    %v246 = vld [vmem:[%s9] sm:$0xff]
    %v247 = vld [vmem:[%s9 + $0x8] sm:$0xff]
    %v248 = vld [vmem:[%s10] sm:$0x1]
    %v250 = vperm.slane %v248, 0
    %v253 = vsel %vm176, %v244, 0
    %255 = vmatpush.msra.mxu0 0.0
    %256 = vmatpush.msra.mxu0 0.0
    %257 = vmatpush.msra.mxu0 0.0
    %258 = vmatpush.msra.mxu0 0.0
    %259 = vmatpush.msra.mxu0 0.0
    %260 = vmatpush.msra.mxu0 0.0
    %261 = vmatpush.msra.mxu0 0.0
    %262 = vmatpush.msra.mxu0 0.0
    %263 = vmatpush.msra.mxu0 0.0
    %264 = vmatpush.msra.mxu0 0.0
    %265 = vmatpush.msra.mxu0 0.0
    %266 = vmatpush.msra.mxu0 0.0
    %267 = vmatpush.msra.mxu0 0.0
    %268 = vmatpush.msra.mxu0 0.0
    %269 = vmatpush.msra.mxu0 %v247
    %270 = vmatpush.msra.mxu0 %v246
    %271 = vmatmul.f32.gmra.mxu0 %v253
    %v272 = vpop.f32.mrf.mxu0
    %v273 = vadd.f32 %v250, %v272
    %274 = vdwg.mxu0
    %vm275 = vcmask 15360
    %v277 = vsel %vm275, %v112, 0
    %v280 = vsel %vm275, %v113, 0
    %v283 = vsel %vm133, %v273, 0
    %285 = vmatpush.msra.mxu0 0.0
    %286 = vmatpush.msra.mxu0 0.0
    %287 = vmatpush.msra.mxu0 0.0
    %288 = vmatpush.msra.mxu0 0.0
    %289 = vmatpush.msra.mxu0 0.0
    %290 = vmatpush.msra.mxu0 0.0
    %291 = vmatpush.msra.mxu0 0.0
    %292 = vmatpush.msra.mxu0 0.0
    %293 = vmatpush.msra.mxu0 0.0
    %294 = vmatpush.msra.mxu0 0.0
    %295 = vmatpush.msra.mxu0 0.0
    %296 = vmatpush.msra.mxu0 0.0
    %297 = vmatpush.msra.mxu0 0.0
    %298 = vmatpush.msra.mxu0 0.0
    %299 = vmatpush.msra.mxu0 0.0
    %300 = vmatpush.msra.mxu0 %v283
    %301 = vmatmul.f32.gmra.mxu0 %v277
    %v302 = vpop.f32.mrf.mxu0
    %v303 = vadd.f32 0.0, %v302
    %304 = vmatmul.f32.gmra.mxu0 %v280
    %v305 = vpop.f32.mrf.mxu0
    %v306 = vadd.f32 0.0, %v305
    %307 = vdwg.mxu0
    %308 = vrot.lane.b32.xlu0 %v106, 16
    %v309 = vpop.permute.xlu0 %308
    %310 = vrot.lane.b32.xlu0 %v107, 16
    %v311 = vpop.permute.xlu0 %310
    %v314 = vsel %vm176, %v303, %v309
    %v315 = vsel %vm176, %v306, %v311
    %v316 = vld [vmem:[%s11] sm:$0xff]
    %v317 = vld [vmem:[%s11 + $0x8] sm:$0xff]
    %v318 = vld [vmem:[%s11 + $0x10] sm:$0xff]
    %v319 = vld [vmem:[%s11 + $0x18] sm:$0xff]
    %v320 = vld [vmem:[%s11 + $0x20] sm:$0xff]
    %v321 = vld [vmem:[%s11 + $0x28] sm:$0xff]
    %v322 = vld [vmem:[%s11 + $0x30] sm:$0x3]
    %v323 = vld [vmem:[%s11 + $0x38] sm:$0x3]
    %v324 = vld [vmem:[%s12] sm:$0x3]
    %v326 = vperm.slane %v324, 0
    %v327 = vperm.slane %v324, 1
    %vm330 = vcmask 211968
    %v332 = vsel %vm330, %v314, 0
    %v335 = vsel %vm330, %v315, 0
    %v338 = vsel %vm133, %v322, 0
    %v341 = vsel %vm133, %v323, 0
    %343 = vmatpush.msra.mxu0 0.0
    %344 = vmatpush.msra.mxu0 0.0
    %345 = vmatpush.msra.mxu0 0.0
    %346 = vmatpush.msra.mxu0 0.0
    %347 = vmatpush.msra.mxu0 0.0
    %348 = vmatpush.msra.mxu0 0.0
    %349 = vmatpush.msra.mxu0 0.0
    %350 = vmatpush.msra.mxu0 0.0
    %351 = vmatpush.msra.mxu0 0.0
    %352 = vmatpush.msra.mxu0 0.0
    %353 = vmatpush.msra.mxu0 0.0
    %354 = vmatpush.msra.mxu0 0.0
    %355 = vmatpush.msra.mxu0 %v338
    %356 = vmatpush.msra.mxu0 %v320
    %357 = vmatpush.msra.mxu0 %v318
    %358 = vmatpush.msra.mxu0 %v316
    %359 = vmatmul.f32.gmra.mxu0 %v332
    %v360 = vpop.f32.mrf.mxu0
    %v361 = vadd.f32 %v326, %v360
    %362 = vmatmul.f32.gmra.mxu0 %v335
    %v363 = vpop.f32.mrf.mxu0
    %v364 = vadd.f32 %v326, %v363
    %365 = vdwg.mxu0
    %366 = vmatpush.msra.mxu0 0.0
    %367 = vmatpush.msra.mxu0 0.0
    %368 = vmatpush.msra.mxu0 0.0
    %369 = vmatpush.msra.mxu0 0.0
    %370 = vmatpush.msra.mxu0 0.0
    %371 = vmatpush.msra.mxu0 0.0
    %372 = vmatpush.msra.mxu0 0.0
    %373 = vmatpush.msra.mxu0 0.0
    %374 = vmatpush.msra.mxu0 0.0
    %375 = vmatpush.msra.mxu0 0.0
    %376 = vmatpush.msra.mxu0 0.0
    %377 = vmatpush.msra.mxu0 0.0
    %378 = vmatpush.msra.mxu0 %v341
    %379 = vmatpush.msra.mxu0 %v321
    %380 = vmatpush.msra.mxu0 %v319
    %381 = vmatpush.msra.mxu0 %v317
    %382 = vmatmul.f32.gmra.mxu0 %v332
    %v383 = vpop.f32.mrf.mxu0
    %v384 = vadd.f32 %v327, %v383
    %385 = vmatmul.f32.gmra.mxu0 %v335
    %v386 = vpop.f32.mrf.mxu0
    %v387 = vadd.f32 %v327, %v386
    %388 = vdwg.mxu0
    %v389 = vmax.f32 %v361, 0.0
    %v390 = vmax.f32 %v384, 0.0
    %v391 = vmax.f32 %v364, 0.0
    %v392 = vmax.f32 %v387, 0.0
    %v393 = vld [vmem:[%s13] sm:$0xff]
    %v394 = vld [vmem:[%s13 + $0x8] sm:$0xff]
    %v395 = vld [vmem:[%s13 + $0x10] sm:$0xff]
    %v396 = vld [vmem:[%s13 + $0x18] sm:$0xff]
    %v397 = vld [vmem:[%s13 + $0x20] sm:$0xff]
    %v398 = vld [vmem:[%s13 + $0x28] sm:$0xff]
    %v399 = vld [vmem:[%s13 + $0x30] sm:$0xff]
    %v400 = vld [vmem:[%s13 + $0x38] sm:$0xff]
    %v401 = vld [vmem:[%s13 + $0x40] sm:$0xff]
    %v402 = vld [vmem:[%s13 + $0x48] sm:$0xff]
    %v403 = vld [vmem:[%s13 + $0x50] sm:$0xff]
    %v404 = vld [vmem:[%s13 + $0x58] sm:$0xff]
    %v405 = vld [vmem:[%s13 + $0x60] sm:$0xff]
    %v406 = vld [vmem:[%s13 + $0x68] sm:$0xff]
    %v407 = vld [vmem:[%s13 + $0x70] sm:$0xff]
    %v408 = vld [vmem:[%s13 + $0x78] sm:$0xff]
    %v409 = vld [vmem:[%s13 + $0x80] sm:$0xff]
    %v410 = vld [vmem:[%s13 + $0x88] sm:$0xff]
    %v411 = vld [vmem:[%s13 + $0x90] sm:$0xff]
    %v412 = vld [vmem:[%s13 + $0x98] sm:$0xff]
    %v413 = vld [vmem:[%s13 + $0xa0] sm:$0xff]
    %v414 = vld [vmem:[%s13 + $0xa8] sm:$0xff]
    %v415 = vld [vmem:[%s13 + $0xb0] sm:$0xff]
    %v416 = vld [vmem:[%s13 + $0xb8] sm:$0xff]
    %v417 = vld [vmem:[%s13 + $0xc0] sm:$0xff]
    %v418 = vld [vmem:[%s13 + $0xc8] sm:$0xff]
    %v419 = vld [vmem:[%s13 + $0xd0] sm:$0xff]
    %v420 = vld [vmem:[%s13 + $0xd8] sm:$0xff]
    %v421 = vld [vmem:[%s13 + $0xe0] sm:$0xff]
    %v422 = vld [vmem:[%s13 + $0xe8] sm:$0xff]
    %v423 = vld [vmem:[%s13 + $0xf0] sm:$0xff]
    %v424 = vld [vmem:[%s13 + $0xf8] sm:$0xff]
    %v425 = vld [vmem:[%s13 + $0x100] sm:$0xff]
    %v426 = vld [vmem:[%s13 + $0x108] sm:$0xff]
    %v427 = vld [vmem:[%s13 + $0x110] sm:$0xff]
    %v428 = vld [vmem:[%s13 + $0x118] sm:$0xff]
    %v429 = vld [vmem:[%s13 + $0x120] sm:$0xff]
    %v430 = vld [vmem:[%s13 + $0x128] sm:$0xff]
    %v431 = vld [vmem:[%s13 + $0x130] sm:$0xff]
    %v432 = vld [vmem:[%s13 + $0x138] sm:$0xff]
    %v433 = vld [vmem:[%s13 + $0x140] sm:$0xff]
    %v434 = vld [vmem:[%s13 + $0x148] sm:$0xff]
    %v435 = vld [vmem:[%s13 + $0x150] sm:$0xff]
    %v436 = vld [vmem:[%s13 + $0x158] sm:$0xff]
    %v437 = vld [vmem:[%s13 + $0x160] sm:$0xff]
    %v438 = vld [vmem:[%s13 + $0x168] sm:$0xff]
    %v439 = vld [vmem:[%s13 + $0x170] sm:$0xff]
    %v440 = vld [vmem:[%s13 + $0x178] sm:$0xff]
    %v441 = vld [vmem:[%s14] sm:$0x3]
    %v443 = vperm.slane %v441, 0
    %v444 = vperm.slane %v441, 1
    %vm447 = vcmask 523264
    %v449 = vsel %vm447, %v390, 0
    %v452 = vsel %vm447, %v392, 0
    %454 = vmatpush.msra.mxu0 %v423
    %455 = vmatpush.msra.mxu0 %v421
    %456 = vmatpush.msra.mxu0 %v419
    %457 = vmatpush.msra.mxu0 %v417
    %458 = vmatpush.msra.mxu0 %v415
    %459 = vmatpush.msra.mxu0 %v413
    %460 = vmatpush.msra.mxu0 %v411
    %461 = vmatpush.msra.mxu0 %v409
    %462 = vmatpush.msra.mxu0 %v407
    %463 = vmatpush.msra.mxu0 %v405
    %464 = vmatpush.msra.mxu0 %v403
    %465 = vmatpush.msra.mxu0 %v401
    %466 = vmatpush.msra.mxu0 %v399
    %467 = vmatpush.msra.mxu0 %v397
    %468 = vmatpush.msra.mxu0 %v395
    %469 = vmatpush.msra.mxu0 %v393
    %470 = vmatmul.f32.gmra.mxu0 %v389
    %v471 = vpop.f32.mrf.mxu0
    %v472 = vadd.f32 %v443, %v471
    %473 = vmatmul.f32.gmra.mxu0 %v391
    %v474 = vpop.f32.mrf.mxu0
    %v475 = vadd.f32 %v443, %v474
    %476 = vdwg.mxu0
    %477 = vmatpush.msra.mxu0 0.0
    %478 = vmatpush.msra.mxu0 0.0
    %479 = vmatpush.msra.mxu0 0.0
    %480 = vmatpush.msra.mxu0 0.0
    %481 = vmatpush.msra.mxu0 0.0
    %482 = vmatpush.msra.mxu0 0.0
    %483 = vmatpush.msra.mxu0 0.0
    %484 = vmatpush.msra.mxu0 0.0
    %485 = vmatpush.msra.mxu0 %v439
    %486 = vmatpush.msra.mxu0 %v437
    %487 = vmatpush.msra.mxu0 %v435
    %488 = vmatpush.msra.mxu0 %v433
    %489 = vmatpush.msra.mxu0 %v431
    %490 = vmatpush.msra.mxu0 %v429
    %491 = vmatpush.msra.mxu0 %v427
    %492 = vmatpush.msra.mxu0 %v425
    %493 = vmatmul.f32.gmra.mxu0 %v449
    %v494 = vpop.f32.mrf.mxu0
    %v495 = vadd.f32 %v472, %v494
    %496 = vmatmul.f32.gmra.mxu0 %v452
    %v497 = vpop.f32.mrf.mxu0
    %v498 = vadd.f32 %v475, %v497
    %499 = vdwg.mxu0
    %500 = vmatpush.msra.mxu0 %v424
    %501 = vmatpush.msra.mxu0 %v422
    %502 = vmatpush.msra.mxu0 %v420
    %503 = vmatpush.msra.mxu0 %v418
    %504 = vmatpush.msra.mxu0 %v416
    %505 = vmatpush.msra.mxu0 %v414
    %506 = vmatpush.msra.mxu0 %v412
    %507 = vmatpush.msra.mxu0 %v410
    %508 = vmatpush.msra.mxu0 %v408
    %509 = vmatpush.msra.mxu0 %v406
    %510 = vmatpush.msra.mxu0 %v404
    %511 = vmatpush.msra.mxu0 %v402
    %512 = vmatpush.msra.mxu0 %v400
    %513 = vmatpush.msra.mxu0 %v398
    %514 = vmatpush.msra.mxu0 %v396
    %515 = vmatpush.msra.mxu0 %v394
    %516 = vmatmul.f32.gmra.mxu0 %v389
    %v517 = vpop.f32.mrf.mxu0
    %v518 = vadd.f32 %v444, %v517
    %519 = vmatmul.f32.gmra.mxu0 %v391
    %v520 = vpop.f32.mrf.mxu0
    %v521 = vadd.f32 %v444, %v520
    %522 = vdwg.mxu0
    %523 = vmatpush.msra.mxu0 0.0
    %524 = vmatpush.msra.mxu0 0.0
    %525 = vmatpush.msra.mxu0 0.0
    %526 = vmatpush.msra.mxu0 0.0
    %527 = vmatpush.msra.mxu0 0.0
    %528 = vmatpush.msra.mxu0 0.0
    %529 = vmatpush.msra.mxu0 0.0
    %530 = vmatpush.msra.mxu0 0.0
    %531 = vmatpush.msra.mxu0 %v440
    %532 = vmatpush.msra.mxu0 %v438
    %533 = vmatpush.msra.mxu0 %v436
    %534 = vmatpush.msra.mxu0 %v434
    %535 = vmatpush.msra.mxu0 %v432
    %536 = vmatpush.msra.mxu0 %v430
    %537 = vmatpush.msra.mxu0 %v428
    %538 = vmatpush.msra.mxu0 %v426
    %539 = vmatmul.f32.gmra.mxu0 %v449
    %v540 = vpop.f32.mrf.mxu0
    %v541 = vadd.f32 %v518, %v540
    %542 = vmatmul.f32.gmra.mxu0 %v452
    %v543 = vpop.f32.mrf.mxu0
    %v544 = vadd.f32 %v521, %v543
    %545 = vdwg.mxu0
    %v546 = vmax.f32 %v495, 0.0
    %v547 = vmax.f32 %v541, 0.0
    %v548 = vmax.f32 %v498, 0.0
    %v549 = vmax.f32 %v544, 0.0
    %v550 = vld [vmem:[%s15] sm:$0xff]
    %v551 = vld [vmem:[%s15 + $0x8] sm:$0xff]
    %v552 = vld [vmem:[%s15 + $0x10] sm:$0xff]
    %v553 = vld [vmem:[%s15 + $0x18] sm:$0xff]
    %v554 = vld [vmem:[%s15 + $0x20] sm:$0xff]
    %v555 = vld [vmem:[%s15 + $0x28] sm:$0xff]
    %v556 = vld [vmem:[%s15 + $0x30] sm:$0xff]
    %v557 = vld [vmem:[%s15 + $0x38] sm:$0xff]
    %v558 = vld [vmem:[%s15 + $0x40] sm:$0xff]
    %v559 = vld [vmem:[%s15 + $0x48] sm:$0xff]
    %v560 = vld [vmem:[%s15 + $0x50] sm:$0xff]
    %v561 = vld [vmem:[%s15 + $0x58] sm:$0xff]
    %v562 = vld [vmem:[%s15 + $0x60] sm:$0xff]
    %v563 = vld [vmem:[%s15 + $0x68] sm:$0xff]
    %v564 = vld [vmem:[%s15 + $0x70] sm:$0xff]
    %v565 = vld [vmem:[%s15 + $0x78] sm:$0xff]
    %v566 = vld [vmem:[%s15 + $0x80] sm:$0xff]
    %v567 = vld [vmem:[%s15 + $0x88] sm:$0xff]
    %v568 = vld [vmem:[%s15 + $0x90] sm:$0xff]
    %v569 = vld [vmem:[%s15 + $0x98] sm:$0xff]
    %v570 = vld [vmem:[%s15 + $0xa0] sm:$0xff]
    %v571 = vld [vmem:[%s15 + $0xa8] sm:$0xff]
    %v572 = vld [vmem:[%s15 + $0xb0] sm:$0xff]
    %v573 = vld [vmem:[%s15 + $0xb8] sm:$0xff]
    %v574 = vld [vmem:[%s16] sm:$0x1]
    %v576 = vperm.slane %v574, 0
    %v579 = vsel %vm447, %v547, 0
    %v582 = vsel %vm447, %v549, 0
    %584 = vmatpush.msra.mxu0 %v565
    %585 = vmatpush.msra.mxu0 %v564
    %586 = vmatpush.msra.mxu0 %v563
    %587 = vmatpush.msra.mxu0 %v562
    %588 = vmatpush.msra.mxu0 %v561
    %589 = vmatpush.msra.mxu0 %v560
    %590 = vmatpush.msra.mxu0 %v559
    %591 = vmatpush.msra.mxu0 %v558
    %592 = vmatpush.msra.mxu0 %v557
    %593 = vmatpush.msra.mxu0 %v556
    %594 = vmatpush.msra.mxu0 %v555
    %595 = vmatpush.msra.mxu0 %v554
    %596 = vmatpush.msra.mxu0 %v553
    %597 = vmatpush.msra.mxu0 %v552
    %598 = vmatpush.msra.mxu0 %v551
    %599 = vmatpush.msra.mxu0 %v550
    %600 = vmatmul.f32.gmra.mxu0 %v546
    %v601 = vpop.f32.mrf.mxu0
    %v602 = vadd.f32 %v576, %v601
    %603 = vmatmul.f32.gmra.mxu0 %v548
    %v604 = vpop.f32.mrf.mxu0
    %v605 = vadd.f32 %v576, %v604
    %606 = vdwg.mxu0
    %607 = vmatpush.msra.mxu0 0.0
    %608 = vmatpush.msra.mxu0 0.0
    %609 = vmatpush.msra.mxu0 0.0
    %610 = vmatpush.msra.mxu0 0.0
    %611 = vmatpush.msra.mxu0 0.0
    %612 = vmatpush.msra.mxu0 0.0
    %613 = vmatpush.msra.mxu0 0.0
    %614 = vmatpush.msra.mxu0 0.0
    %615 = vmatpush.msra.mxu0 %v573
    %616 = vmatpush.msra.mxu0 %v572
    %617 = vmatpush.msra.mxu0 %v571
    %618 = vmatpush.msra.mxu0 %v570
    %619 = vmatpush.msra.mxu0 %v569
    %620 = vmatpush.msra.mxu0 %v568
    %621 = vmatpush.msra.mxu0 %v567
    %622 = vmatpush.msra.mxu0 %v566
    %623 = vmatmul.f32.gmra.mxu0 %v579
    %v624 = vpop.f32.mrf.mxu0
    %v625 = vadd.f32 %v602, %v624
    %626 = vmatmul.f32.gmra.mxu0 %v582
    %v627 = vpop.f32.mrf.mxu0
    %v628 = vadd.f32 %v605, %v627
    %629 = vdwg.mxu0
    %v630 = vlaneseq
    %v631 = vand.u32 %v630, 127
    %vm632 = vcmp.ge.s32.totalorder %v631, 8
    %v633 = vmax.f32 %v625, -4.0
    %v634 = vmax.f32 %v628, -4.0
    %v635 = vmin.f32 %v633, 15.0
    %v636 = vmin.f32 %v634, 15.0
    %v637 = vsel %vm632, %v635, %v625
    %v638 = vsel %vm632, %v636, %v628
    %v640 = vsel %vm176, %v110, 0
    %642 = vmatpush.msra.mxu0 0.0
    %643 = vmatpush.msra.mxu0 0.0
    %644 = vmatpush.msra.mxu0 0.0
    %645 = vmatpush.msra.mxu0 0.0
    %646 = vmatpush.msra.mxu0 0.0
    %647 = vmatpush.msra.mxu0 0.0
    %648 = vmatpush.msra.mxu0 0.0
    %649 = vmatpush.msra.mxu0 0.0
    %650 = vmatpush.msra.mxu0 0.0
    %651 = vmatpush.msra.mxu0 0.0
    %652 = vmatpush.msra.mxu0 0.0
    %653 = vmatpush.msra.mxu0 0.0
    %654 = vmatpush.msra.mxu0 0.0
    %655 = vmatpush.msra.mxu0 0.0
    %656 = vmatpush.msra.mxu0 %v638
    %657 = vmatpush.msra.mxu0 %v637
    %658 = vmatmul.f32.gmra.mxu0 %v640
    %v659 = vpop.f32.mrf.mxu0
    %v660 = vadd.f32 0.0, %v659
    %661 = vdwg.mxu0
    %662 = vrot.lane.b32.xlu0 %v108, 16
    %v663 = vpop.permute.xlu0 %662
    %664 = vrot.lane.b32.xlu0 %v109, 16
    %v665 = vpop.permute.xlu0 %664
    %v668 = vsel %vm176, %v303, %v663
    %v669 = vsel %vm176, %v306, %v665
    %v670 = vld [vmem:[#allocation2] sm:$0xff]
    %v671 = vld [vmem:[#allocation2 + $0x8] sm:$0xff]
    %v672 = vld [vmem:[#allocation2 + $0x10] sm:$0xff]
    %v673 = vld [vmem:[#allocation2 + $0x18] sm:$0xff]
    %v674 = vld [vmem:[#allocation2 + $0x20] sm:$0xff]
    %v675 = vld [vmem:[#allocation2 + $0x28] sm:$0xff]
    %v676 = vld [vmem:[#allocation2 + $0x30] sm:$0x3]
    %v677 = vld [vmem:[#allocation2 + $0x38] sm:$0x3]
    %v678 = vld [vmem:[%s18] sm:$0x3]
    %v680 = vperm.slane %v678, 0
    %v681 = vperm.slane %v678, 1
    %v685 = vsel %vm330, %v668, 0
    %v688 = vsel %vm330, %v669, 0
    %v691 = vsel %vm133, %v676, 0
    %v694 = vsel %vm133, %v677, 0
    %696 = vmatpush.msra.mxu0 0.0
    %697 = vmatpush.msra.mxu0 0.0
    %698 = vmatpush.msra.mxu0 0.0
    %699 = vmatpush.msra.mxu0 0.0
    %700 = vmatpush.msra.mxu0 0.0
    %701 = vmatpush.msra.mxu0 0.0
    %702 = vmatpush.msra.mxu0 0.0
    %703 = vmatpush.msra.mxu0 0.0
    %704 = vmatpush.msra.mxu0 0.0
    %705 = vmatpush.msra.mxu0 0.0
    %706 = vmatpush.msra.mxu0 0.0
    %707 = vmatpush.msra.mxu0 0.0
    %708 = vmatpush.msra.mxu0 %v691
    %709 = vmatpush.msra.mxu0 %v674
    %710 = vmatpush.msra.mxu0 %v672
    %711 = vmatpush.msra.mxu0 %v670
    %712 = vmatmul.f32.gmra.mxu0 %v685
    %v713 = vpop.f32.mrf.mxu0
    %v714 = vadd.f32 %v680, %v713
    %715 = vmatmul.f32.gmra.mxu0 %v688
    %v716 = vpop.f32.mrf.mxu0
    %v717 = vadd.f32 %v680, %v716
    %718 = vdwg.mxu0
    %719 = vmatpush.msra.mxu0 0.0
    %720 = vmatpush.msra.mxu0 0.0
    %721 = vmatpush.msra.mxu0 0.0
    %722 = vmatpush.msra.mxu0 0.0
    %723 = vmatpush.msra.mxu0 0.0
    %724 = vmatpush.msra.mxu0 0.0
    %725 = vmatpush.msra.mxu0 0.0
    %726 = vmatpush.msra.mxu0 0.0
    %727 = vmatpush.msra.mxu0 0.0
    %728 = vmatpush.msra.mxu0 0.0
    %729 = vmatpush.msra.mxu0 0.0
    %730 = vmatpush.msra.mxu0 0.0
    %731 = vmatpush.msra.mxu0 %v694
    %732 = vmatpush.msra.mxu0 %v675
    %733 = vmatpush.msra.mxu0 %v673
    %734 = vmatpush.msra.mxu0 %v671
    %735 = vmatmul.f32.gmra.mxu0 %v685
    %v736 = vpop.f32.mrf.mxu0
    %v737 = vadd.f32 %v681, %v736
    %738 = vmatmul.f32.gmra.mxu0 %v688
    %v739 = vpop.f32.mrf.mxu0
    %v740 = vadd.f32 %v681, %v739
    %741 = vdwg.mxu0
    %v742 = vmax.f32 %v714, 0.0
    %v743 = vmax.f32 %v737, 0.0
    %v744 = vmax.f32 %v717, 0.0
    %v745 = vmax.f32 %v740, 0.0
    %v746 = vld [vmem:[#allocation4] sm:$0xff]
    %v747 = vld [vmem:[#allocation4 + $0x8] sm:$0xff]
    %v748 = vld [vmem:[#allocation4 + $0x10] sm:$0xff]
    %v749 = vld [vmem:[#allocation4 + $0x18] sm:$0xff]
    %v750 = vld [vmem:[#allocation4 + $0x20] sm:$0xff]
    %v751 = vld [vmem:[#allocation4 + $0x28] sm:$0xff]
    %v752 = vld [vmem:[#allocation4 + $0x30] sm:$0xff]
    %v753 = vld [vmem:[#allocation4 + $0x38] sm:$0xff]
    %v754 = vld [vmem:[#allocation4 + $0x40] sm:$0xff]
    %v755 = vld [vmem:[#allocation4 + $0x48] sm:$0xff]
    %v756 = vld [vmem:[#allocation4 + $0x50] sm:$0xff]
    %v757 = vld [vmem:[#allocation4 + $0x58] sm:$0xff]
    %v758 = vld [vmem:[#allocation4 + $0x60] sm:$0xff]
    %v759 = vld [vmem:[#allocation4 + $0x68] sm:$0xff]
    %v760 = vld [vmem:[#allocation4 + $0x70] sm:$0xff]
    %v761 = vld [vmem:[#allocation4 + $0x78] sm:$0xff]
    %v762 = vld [vmem:[#allocation4 + $0x80] sm:$0xff]
    %v763 = vld [vmem:[#allocation4 + $0x88] sm:$0xff]
    %v764 = vld [vmem:[#allocation4 + $0x90] sm:$0xff]
    %v765 = vld [vmem:[#allocation4 + $0x98] sm:$0xff]
    %v766 = vld [vmem:[#allocation4 + $0xa0] sm:$0xff]
    %v767 = vld [vmem:[#allocation4 + $0xa8] sm:$0xff]
    %v768 = vld [vmem:[#allocation4 + $0xb0] sm:$0xff]
    %v769 = vld [vmem:[#allocation4 + $0xb8] sm:$0xff]
    %v770 = vld [vmem:[#allocation4 + $0xc0] sm:$0xff]
    %v771 = vld [vmem:[#allocation4 + $0xc8] sm:$0xff]
    %v772 = vld [vmem:[#allocation4 + $0xd0] sm:$0xff]
    %v773 = vld [vmem:[#allocation4 + $0xd8] sm:$0xff]
    %v774 = vld [vmem:[#allocation4 + $0xe0] sm:$0xff]
    %v775 = vld [vmem:[#allocation4 + $0xe8] sm:$0xff]
    %v776 = vld [vmem:[#allocation4 + $0xf0] sm:$0xff]
    %v777 = vld [vmem:[#allocation4 + $0xf8] sm:$0xff]
    %v778 = vld [vmem:[#allocation4 + $0x100] sm:$0xff]
    %v779 = vld [vmem:[#allocation4 + $0x108] sm:$0xff]
    %v780 = vld [vmem:[#allocation4 + $0x110] sm:$0xff]
    %v781 = vld [vmem:[#allocation4 + $0x118] sm:$0xff]
    %v782 = vld [vmem:[#allocation4 + $0x120] sm:$0xff]
    %v783 = vld [vmem:[#allocation4 + $0x128] sm:$0xff]
    %v784 = vld [vmem:[#allocation4 + $0x130] sm:$0xff]
    %v785 = vld [vmem:[#allocation4 + $0x138] sm:$0xff]
    %v786 = vld [vmem:[#allocation4 + $0x140] sm:$0xff]
    %v787 = vld [vmem:[#allocation4 + $0x148] sm:$0xff]
    %v788 = vld [vmem:[#allocation4 + $0x150] sm:$0xff]
    %v789 = vld [vmem:[#allocation4 + $0x158] sm:$0xff]
    %v790 = vld [vmem:[#allocation4 + $0x160] sm:$0xff]
    %v791 = vld [vmem:[#allocation4 + $0x168] sm:$0xff]
    %v792 = vld [vmem:[#allocation4 + $0x170] sm:$0xff]
    %v793 = vld [vmem:[#allocation4 + $0x178] sm:$0xff]
    %v794 = vld [vmem:[%s20] sm:$0x3]
    %v796 = vperm.slane %v794, 0
    %v797 = vperm.slane %v794, 1
    %v801 = vsel %vm447, %v743, 0
    %v804 = vsel %vm447, %v745, 0
    %806 = vmatpush.msra.mxu0 %v776
    %807 = vmatpush.msra.mxu0 %v774
    %808 = vmatpush.msra.mxu0 %v772
    %809 = vmatpush.msra.mxu0 %v770
    %810 = vmatpush.msra.mxu0 %v768
    %811 = vmatpush.msra.mxu0 %v766
    %812 = vmatpush.msra.mxu0 %v764
    %813 = vmatpush.msra.mxu0 %v762
    %814 = vmatpush.msra.mxu0 %v760
    %815 = vmatpush.msra.mxu0 %v758
    %816 = vmatpush.msra.mxu0 %v756
    %817 = vmatpush.msra.mxu0 %v754
    %818 = vmatpush.msra.mxu0 %v752
    %819 = vmatpush.msra.mxu0 %v750
    %820 = vmatpush.msra.mxu0 %v748
    %821 = vmatpush.msra.mxu0 %v746
    %822 = vmatmul.f32.gmra.mxu0 %v742
    %v823 = vpop.f32.mrf.mxu0
    %v824 = vadd.f32 %v796, %v823
    %825 = vmatmul.f32.gmra.mxu0 %v744
    %v826 = vpop.f32.mrf.mxu0
    %v827 = vadd.f32 %v796, %v826
    %828 = vdwg.mxu0
    %829 = vmatpush.msra.mxu0 0.0
    %830 = vmatpush.msra.mxu0 0.0
    %831 = vmatpush.msra.mxu0 0.0
    %832 = vmatpush.msra.mxu0 0.0
    %833 = vmatpush.msra.mxu0 0.0
    %834 = vmatpush.msra.mxu0 0.0
    %835 = vmatpush.msra.mxu0 0.0
    %836 = vmatpush.msra.mxu0 0.0
    %837 = vmatpush.msra.mxu0 %v792
    %838 = vmatpush.msra.mxu0 %v790
    %839 = vmatpush.msra.mxu0 %v788
    %840 = vmatpush.msra.mxu0 %v786
    %841 = vmatpush.msra.mxu0 %v784
    %842 = vmatpush.msra.mxu0 %v782
    %843 = vmatpush.msra.mxu0 %v780
    %844 = vmatpush.msra.mxu0 %v778
    %845 = vmatmul.f32.gmra.mxu0 %v801
    %v846 = vpop.f32.mrf.mxu0
    %v847 = vadd.f32 %v824, %v846
    %848 = vmatmul.f32.gmra.mxu0 %v804
    %v849 = vpop.f32.mrf.mxu0
    %v850 = vadd.f32 %v827, %v849
    %851 = vdwg.mxu0
    %852 = vmatpush.msra.mxu0 %v777
    %853 = vmatpush.msra.mxu0 %v775
    %854 = vmatpush.msra.mxu0 %v773
    %855 = vmatpush.msra.mxu0 %v771
    %856 = vmatpush.msra.mxu0 %v769
    %857 = vmatpush.msra.mxu0 %v767
    %858 = vmatpush.msra.mxu0 %v765
    %859 = vmatpush.msra.mxu0 %v763
    %860 = vmatpush.msra.mxu0 %v761
    %861 = vmatpush.msra.mxu0 %v759
    %862 = vmatpush.msra.mxu0 %v757
    %863 = vmatpush.msra.mxu0 %v755
    %864 = vmatpush.msra.mxu0 %v753
    %865 = vmatpush.msra.mxu0 %v751
    %866 = vmatpush.msra.mxu0 %v749
    %867 = vmatpush.msra.mxu0 %v747
    %868 = vmatmul.f32.gmra.mxu0 %v742
    %v869 = vpop.f32.mrf.mxu0
    %v870 = vadd.f32 %v797, %v869
    %871 = vmatmul.f32.gmra.mxu0 %v744
    %v872 = vpop.f32.mrf.mxu0
    %v873 = vadd.f32 %v797, %v872
    %874 = vdwg.mxu0
    %875 = vmatpush.msra.mxu0 0.0
    %876 = vmatpush.msra.mxu0 0.0
    %877 = vmatpush.msra.mxu0 0.0
    %878 = vmatpush.msra.mxu0 0.0
    %879 = vmatpush.msra.mxu0 0.0
    %880 = vmatpush.msra.mxu0 0.0
    %881 = vmatpush.msra.mxu0 0.0
    %882 = vmatpush.msra.mxu0 0.0
    %883 = vmatpush.msra.mxu0 %v793
    %884 = vmatpush.msra.mxu0 %v791
    %885 = vmatpush.msra.mxu0 %v789
    %886 = vmatpush.msra.mxu0 %v787
    %887 = vmatpush.msra.mxu0 %v785
    %888 = vmatpush.msra.mxu0 %v783
    %889 = vmatpush.msra.mxu0 %v781
    %890 = vmatpush.msra.mxu0 %v779
    %891 = vmatmul.f32.gmra.mxu0 %v801
    %v892 = vpop.f32.mrf.mxu0
    %v893 = vadd.f32 %v870, %v892
    %894 = vmatmul.f32.gmra.mxu0 %v804
    %v895 = vpop.f32.mrf.mxu0
    %v896 = vadd.f32 %v873, %v895
    %897 = vdwg.mxu0
    %v898 = vmax.f32 %v847, 0.0
    %v899 = vmax.f32 %v893, 0.0
    %v900 = vmax.f32 %v850, 0.0
    %v901 = vmax.f32 %v896, 0.0
    %v902 = vld [vmem:[%s21] sm:$0xff]
    %v903 = vld [vmem:[%s21 + $0x8] sm:$0xff]
    %v904 = vld [vmem:[%s21 + $0x10] sm:$0xff]
    %v905 = vld [vmem:[%s21 + $0x18] sm:$0xff]
    %v906 = vld [vmem:[%s21 + $0x20] sm:$0xff]
    %v907 = vld [vmem:[%s21 + $0x28] sm:$0xff]
    %v908 = vld [vmem:[%s21 + $0x30] sm:$0xff]
    %v909 = vld [vmem:[%s21 + $0x38] sm:$0xff]
    %v910 = vld [vmem:[%s21 + $0x40] sm:$0xff]
    %v911 = vld [vmem:[%s21 + $0x48] sm:$0xff]
    %v912 = vld [vmem:[%s21 + $0x50] sm:$0xff]
    %v913 = vld [vmem:[%s21 + $0x58] sm:$0xff]
    %v914 = vld [vmem:[%s21 + $0x60] sm:$0xff]
    %v915 = vld [vmem:[%s21 + $0x68] sm:$0xff]
    %v916 = vld [vmem:[%s21 + $0x70] sm:$0xff]
    %v917 = vld [vmem:[%s21 + $0x78] sm:$0xff]
    %v918 = vld [vmem:[%s21 + $0x80] sm:$0xff]
    %v919 = vld [vmem:[%s21 + $0x88] sm:$0xff]
    %v920 = vld [vmem:[%s21 + $0x90] sm:$0xff]
    %v921 = vld [vmem:[%s21 + $0x98] sm:$0xff]
    %v922 = vld [vmem:[%s21 + $0xa0] sm:$0xff]
    %v923 = vld [vmem:[%s21 + $0xa8] sm:$0xff]
    %v924 = vld [vmem:[%s21 + $0xb0] sm:$0xff]
    %v925 = vld [vmem:[%s21 + $0xb8] sm:$0xff]
    %v926 = vld [vmem:[%s22] sm:$0x1]
    %v928 = vperm.slane %v926, 0
    %v931 = vsel %vm447, %v899, 0
    %v934 = vsel %vm447, %v901, 0
    %936 = vmatpush.msra.mxu0 %v917
    %937 = vmatpush.msra.mxu0 %v916
    %938 = vmatpush.msra.mxu0 %v915
    %939 = vmatpush.msra.mxu0 %v914
    %940 = vmatpush.msra.mxu0 %v913
    %941 = vmatpush.msra.mxu0 %v912
    %942 = vmatpush.msra.mxu0 %v911
    %943 = vmatpush.msra.mxu0 %v910
    %944 = vmatpush.msra.mxu0 %v909
    %945 = vmatpush.msra.mxu0 %v908
    %946 = vmatpush.msra.mxu0 %v907
    %947 = vmatpush.msra.mxu0 %v906
    %948 = vmatpush.msra.mxu0 %v905
    %949 = vmatpush.msra.mxu0 %v904
    %950 = vmatpush.msra.mxu0 %v903
    %951 = vmatpush.msra.mxu0 %v902
    %952 = vmatmul.f32.gmra.mxu0 %v898
    %v953 = vpop.f32.mrf.mxu0
    %v954 = vadd.f32 %v928, %v953
    %955 = vmatmul.f32.gmra.mxu0 %v900
    %v956 = vpop.f32.mrf.mxu0
    %v957 = vadd.f32 %v928, %v956
    %958 = vdwg.mxu0
    %959 = vmatpush.msra.mxu0 0.0
    %960 = vmatpush.msra.mxu0 0.0
    %961 = vmatpush.msra.mxu0 0.0
    %962 = vmatpush.msra.mxu0 0.0
    %963 = vmatpush.msra.mxu0 0.0
    %964 = vmatpush.msra.mxu0 0.0
    %965 = vmatpush.msra.mxu0 0.0
    %966 = vmatpush.msra.mxu0 0.0
    %967 = vmatpush.msra.mxu0 %v925
    %968 = vmatpush.msra.mxu0 %v924
    %969 = vmatpush.msra.mxu0 %v923
    %970 = vmatpush.msra.mxu0 %v922
    %971 = vmatpush.msra.mxu0 %v921
    %972 = vmatpush.msra.mxu0 %v920
    %973 = vmatpush.msra.mxu0 %v919
    %974 = vmatpush.msra.mxu0 %v918
    %975 = vmatmul.f32.gmra.mxu0 %v931
    %v976 = vpop.f32.mrf.mxu0
    %v977 = vadd.f32 %v954, %v976
    %978 = vmatmul.f32.gmra.mxu0 %v934
    %v979 = vpop.f32.mrf.mxu0
    %v980 = vadd.f32 %v957, %v979
    %981 = vdwg.mxu0
    %v982 = vmax.f32 %v977, -4.0
    %v983 = vmax.f32 %v980, -4.0
    %v984 = vmin.f32 %v982, 15.0
    %v985 = vmin.f32 %v983, 15.0
    %v986 = vsel %vm632, %v984, %v977
    %v987 = vsel %vm632, %v985, %v980
    %988 = vmatpush.msra.mxu0 0.0
    %989 = vmatpush.msra.mxu0 0.0
    %990 = vmatpush.msra.mxu0 0.0
    %991 = vmatpush.msra.mxu0 0.0
    %992 = vmatpush.msra.mxu0 0.0
    %993 = vmatpush.msra.mxu0 0.0
    %994 = vmatpush.msra.mxu0 0.0
    %995 = vmatpush.msra.mxu0 0.0
    %996 = vmatpush.msra.mxu0 0.0
    %997 = vmatpush.msra.mxu0 0.0
    %998 = vmatpush.msra.mxu0 0.0
    %999 = vmatpush.msra.mxu0 0.0
    %1000 = vmatpush.msra.mxu0 0.0
    %1001 = vmatpush.msra.mxu0 0.0
    %1002 = vmatpush.msra.mxu0 %v987
    %1003 = vmatpush.msra.mxu0 %v986
    %1004 = vmatmul.f32.gmra.mxu0 %v640
    %v1005 = vpop.f32.mrf.mxu0
    %v1006 = vadd.f32 0.0, %v1005
    %1007 = vdwg.mxu0
    %1009 = vrot.lane.b32.xlu0 %v1006, 16
    %v1010 = vpop.permute.xlu0 %1009
    %v1012 = vsel %vm176, %v660, %v1010
    %vm1013 = vcmask 254976
    %1014 = vst.msk [vmem:[%s23] sm:$0x3] %vm1013, %v1012
    // Predicated region
    $region102: #{vae_forward.3} parent=1 // pred_check
      _
    $region103: #{vae_forward.3} parent=1 // pred_check_branch
      %1016 = sbr.rel (0) target = $region105
    $region104: #{vae_forward.3} parent=1 // pred_region
      _
    $region105: #{vae_forward.3} parent=1 // pred_fallthru
      _
    // Predicated region
    $region106: #{vae_forward.3} parent=1 // pred_check
      _
    $region107: #{vae_forward.3} parent=1 // pred_check_branch
      %1018 = sbr.rel (0) target = $region109
    $region108: #{vae_forward.3} parent=1 // pred_region
      _
    $region109: #{vae_forward.3} parent=1 // pred_fallthru
      _
    %1019 = vsyncpa [#allocation3], 1
    %1020 = vsyncpa [#allocation5], 1

</llo_original>
